<compile_context>
chip_gen: v5e
topology: v5e:2x2
jax: 0.10.0
libtpu: 0.0.40
codegen_flags: <defaults>
</compile_context>

<pallas_src>
import jax
import jax.numpy as jnp
from jax import lax
from jax.experimental import pallas as pl
from jax.experimental.pallas import tpu as pltpu


def _pick_head_group(num_heads, head_dim, target_lanes=256):
    """Smallest divisor G of num_heads with G*head_dim >= target_lanes,
    falling back to all heads in one group (toy shapes)."""
    for g in range(1, num_heads + 1):
        if num_heads % g == 0 and g * head_dim >= target_lanes:
            return g
    return num_heads


def attention_kernel(x_ref, wq_ref, wk_ref, wv_ref, wp_ref, bias_ref,
                     out_ref, attn_ref, acc_ref, o_scratch):
    # x_ref:     (N, C)        current batch row, bf16 (batch dim squeezed)
    # wq_ref:    (NG, C, GD)   resident Q weight slabs (softmax scale folded), bf16
    # wk_ref:    (NG, C, GD)   resident K weight slabs, bf16
    # wv_ref:    (NG, C, GD)   resident V weight slabs, bf16
    # wp_ref:    (NG, GD, C)   resident output-projection slabs, bf16
    # bias_ref:  (1, C)        output projection bias, f32
    # out_ref:   (N, C)        output block for this batch (written at last g)
    # attn_ref:  (G, N, N)     attention probs for this (batch, head-group)
    # acc_ref:   (N, C) f32    VMEM accumulator carried across the group axis
    # o_scratch: (N, GD) bf16  staging buffer for per-head attn@v outputs
    g = pl.program_id(1)
    last_g = pl.num_programs(1) - 1
    G = attn_ref.shape[0]
    GD = wq_ref.shape[2]
    Dh = GD // G

    x = x_ref[...]                                                  # (N, C) bf16

    # One wide QKV projection per head-group (bf16 operands, f32 accumulate).
    q = jnp.dot(x, wq_ref[g], preferred_element_type=jnp.float32)   # (N, GD)
    k = jnp.dot(x, wk_ref[g], preferred_element_type=jnp.float32)   # (N, GD)
    v = jnp.dot(x, wv_ref[g], preferred_element_type=jnp.float32)   # (N, GD)
    qb = q.astype(jnp.bfloat16)
    kb = k.astype(jnp.bfloat16)
    vb = v.astype(jnp.bfloat16)

    # Per-head scores / softmax / weighted values: short static unroll.
    for hl in range(G):
        sl = slice(hl * Dh, (hl + 1) * Dh)
        # scores = q_h @ k_h^T (contract last dims, no explicit transpose).
        s = lax.dot_general(qb[:, sl], kb[:, sl], (((1,), (1,)), ((), ())),
                            preferred_element_type=jnp.float32)     # (N, N) f32
        m = jnp.max(s, axis=-1, keepdims=True)
        e = jnp.exp(s - m)
        denom = jnp.sum(e, axis=-1, keepdims=True)
        p = e * pl.reciprocal(denom, approx=True)                   # (N, N) f32
        attn_ref[hl] = p.astype(attn_ref.dtype)
        o_h = jnp.dot(p.astype(jnp.bfloat16), vb[:, sl],
                      preferred_element_type=jnp.float32)           # (N, Dh)
        o_scratch[:, sl] = o_h.astype(jnp.bfloat16)

    # Group contribution to the output projection at full group depth (GD).
    contrib = jnp.dot(o_scratch[...], wp_ref[g],
                      preferred_element_type=jnp.float32)           # (N, C) f32

    @pl.when(g == 0)
    def _init():
        acc_ref[...] = jnp.broadcast_to(
            bias_ref[...].astype(jnp.float32), acc_ref.shape)

    acc_ref[...] += contrib

    @pl.when(g == last_g)
    def _finalize():
        out_ref[...] = acc_ref[...].astype(out_ref.dtype)


def attention_forward(x, w_qkv, w_proj, b_proj, num_heads):
    """x: (B, N, C); w_qkv: (C, 3C) [x @ w_qkv layout]; w_proj: (C, C) [in, out];
    b_proj: (1, C). Returns (out (B, N, C), attn (B, H, N, N))."""
    B, N, C = x.shape
    H = num_heads
    Dh = C // H
    scale = Dh ** (-0.5)
    out_dtype = x.dtype

    G = _pick_head_group(H, Dh)     # heads per grid step
    NG = H // G                     # number of head groups
    GD = G * Dh

    # One-time weight reorganization in the wrapper (plain XLA).  Columns of
    # w_qkv are ordered [qkv_index, head, dh] (matching the torch
    # reshape(B, N, 3, H, Dh).permute(2, 0, 3, 1, 4)), so heads are contiguous
    # inside each third and a head-group slab is a contiguous column slice.
    def group_slabs(w):             # (C, C) -> (NG, C, GD)
        return jnp.transpose(w.reshape(C, NG, GD), (1, 0, 2))

    wq = group_slabs(w_qkv[:, 0 * C:1 * C] * scale).astype(jnp.bfloat16)
    wk = group_slabs(w_qkv[:, 1 * C:2 * C]).astype(jnp.bfloat16)
    wv = group_slabs(w_qkv[:, 2 * C:3 * C]).astype(jnp.bfloat16)
    wp = w_proj.reshape(NG, GD, C).astype(jnp.bfloat16)             # (NG, GD, C)
    bias = b_proj.astype(jnp.float32)                               # (1, C)
    xb = x.astype(jnp.bfloat16)

    out_shapes = (
        jax.ShapeDtypeStruct((B, N, C), out_dtype),
        jax.ShapeDtypeStruct((B, H, N, N), out_dtype),
    )

    return pl.pallas_call(
        attention_kernel,
        out_shape=out_shapes,
        grid=(B, NG),
        in_specs=[
            # x: re-fetched only when the batch index changes.
            pl.BlockSpec((None, N, C), lambda b, g: (b, 0, 0)),
            # Weights: constant index_map -> DMA'd once, VMEM-resident.
            pl.BlockSpec((NG, C, GD), lambda b, g: (0, 0, 0)),       # wq (scaled)
            pl.BlockSpec((NG, C, GD), lambda b, g: (0, 0, 0)),       # wk
            pl.BlockSpec((NG, C, GD), lambda b, g: (0, 0, 0)),       # wv
            pl.BlockSpec((NG, GD, C), lambda b, g: (0, 0, 0)),       # wp
            pl.BlockSpec((1, C), lambda b, g: (0, 0)),               # bias
        ],
        out_specs=(
            pl.BlockSpec((None, N, C), lambda b, g: (b, 0, 0)),          # out
            pl.BlockSpec((None, G, N, N), lambda b, g: (b, g, 0, 0)),    # attn
        ),
        scratch_shapes=[
            pltpu.VMEM((N, C), jnp.float32),     # output-projection accumulator
            pltpu.VMEM((N, GD), jnp.bfloat16),   # per-group o staging buffer
        ],
        compiler_params=pltpu.CompilerParams(
            dimension_semantics=("parallel", "arbitrary")),
    )(xb, wq, wk, wv, wp, bias)


def attention_reference(x, w_qkv, w_proj, b_proj, num_heads):
    # Pure-JAX f32 reference mirroring the torch forward exactly.
    B, N, C = x.shape
    H = num_heads
    Dh = C // H
    scale = Dh ** (-0.5)
    qkv = x @ w_qkv                                          # (B, N, 3C)
    qkv = qkv.reshape(B, N, 3, H, Dh).transpose(2, 0, 3, 1, 4)
    q, k, v = qkv[0], qkv[1], qkv[2]                         # (B, H, N, Dh)
    attn = jnp.einsum('bhnd,bhmd->bhnm', q, k) * scale
    attn = jax.nn.softmax(attn, axis=-1)
    o = jnp.einsum('bhnm,bhmd->bhnd', attn, v)
    o = o.transpose(0, 2, 1, 3).reshape(B, N, C)
    o = o @ w_proj + b_proj[0]
    return o, attn


if __name__ == "__main__":
    # Small shapes consistent with the module: dim=32, num_heads=8 -> head_dim=4.
    B, N, C = 2, 8, 32
    num_heads = 8

    key = jax.random.PRNGKey(0)
    k_x, k_wqkv, k_wproj, k_bproj = jax.random.split(key, 4)

    x = jax.random.normal(k_x, (B, N, C), dtype=jnp.float32)
    # qkv: Linear(C, 3C, bias=False); proj: Linear(C, C, bias=True).
    # Stored already transposed to (in, out) so the math is x @ W.
    w_qkv = jax.random.normal(k_wqkv, (C, 3 * C), dtype=jnp.float32) * 0.05
    w_proj = jax.random.normal(k_wproj, (C, C), dtype=jnp.float32) * 0.05
    b_proj = jax.random.normal(k_bproj, (1, C), dtype=jnp.float32) * 0.05

    out, attn = attention_forward(x, w_qkv, w_proj, b_proj, num_heads)
    out = jax.block_until_ready(out)
    attn = jax.block_until_ready(attn)

    out_ref, attn_ref = attention_reference(x, w_qkv, w_proj, b_proj, num_heads)
    # bf16 MXU operands + approx reciprocal -> ~1e-2 tolerances vs f32 reference.
    assert jnp.allclose(out, out_ref, atol=2e-2, rtol=2e-2), (
        float(jnp.max(jnp.abs(out - out_ref))))
    assert jnp.allclose(attn, attn_ref, atol=1e-2, rtol=1e-2), (
        float(jnp.max(jnp.abs(attn - attn_ref))))

    # TODO(synk): attn_drop / proj_drop omitted — identity at the module's
    # default p=0.0; a PRNG-based dropout would use pltpu.prng_* if needed.
    print("KERNEL_OK")
</pallas_src>

<mosaic_0001>
module attributes {stable_mosaic.version = 11 : i64} {
  func.func @attention_kernel(%arg0: i32, %arg1: i32, %arg2: memref<1x8x32xbf16, #tpu.memory_space<vmem>>, %arg3: memref<1x32x32xbf16, #tpu.memory_space<vmem>>, %arg4: memref<1x32x32xbf16, #tpu.memory_space<vmem>>, %arg5: memref<1x32x32xbf16, #tpu.memory_space<vmem>>, %arg6: memref<1x32x32xbf16, #tpu.memory_space<vmem>>, %arg7: memref<1x32xf32, #tpu.memory_space<vmem>>, %arg8: memref<1x8x32xf32, #tpu.memory_space<vmem>>, %arg9: memref<1x8x8x8xf32, #tpu.memory_space<vmem>>, %arg10: memref<8x32xf32, #tpu.memory_space<vmem>>, %arg11: memref<8x32xbf16, #tpu.memory_space<vmem>>) attributes {dimension_semantics = [#tpu.dimension_semantics<parallel>, #tpu.dimension_semantics<arbitrary>], iteration_bounds = array<i64: 2, 1>, scalar_prefetch = 0 : i64, scratch_operands = 2 : i64, tpu.core_type = #tpu.core_type<tc>, window_params = [{transform_indices = @transform_0, window_bounds = array<i64: 1, 8, 32>}, {pipeline_mode = #tpu.pipeline_mode<synchronous>, transform_indices = @transform_1, window_bounds = array<i64: 1, 32, 32>}, {pipeline_mode = #tpu.pipeline_mode<synchronous>, transform_indices = @transform_2, window_bounds = array<i64: 1, 32, 32>}, {pipeline_mode = #tpu.pipeline_mode<synchronous>, transform_indices = @transform_3, window_bounds = array<i64: 1, 32, 32>}, {pipeline_mode = #tpu.pipeline_mode<synchronous>, transform_indices = @transform_4, window_bounds = array<i64: 1, 32, 32>}, {pipeline_mode = #tpu.pipeline_mode<synchronous>, transform_indices = @transform_5, window_bounds = array<i64: 1, 32>}, {transform_indices = @transform_6, window_bounds = array<i64: 1, 8, 32>}, {transform_indices = @transform_7, window_bounds = array<i64: 1, 8, 8, 8>}]} {
    %c0 = arith.constant 0 : index
    %c0_0 = arith.constant 0 : index
    %c0_1 = arith.constant 0 : index
    %0 = vector.load %arg2[%c0, %c0_0, %c0_1] : memref<1x8x32xbf16, #tpu.memory_space<vmem>>, vector<1x8x32xbf16>
    %1 = vector.shape_cast %0 : vector<1x8x32xbf16> to vector<8x32xbf16>
    %2 = arith.index_cast %arg1 : i32 to index
    %c0_2 = arith.constant 0 : index
    %c0_3 = arith.constant 0 : index
    %3 = vector.load %arg3[%2, %c0_2, %c0_3] : memref<1x32x32xbf16, #tpu.memory_space<vmem>>, vector<1x32x32xbf16>
    %4 = vector.shape_cast %3 : vector<1x32x32xbf16> to vector<32x32xbf16>
    %cst = arith.constant dense<0.000000e+00> : vector<8x32xf32>
    %5 = tpu.matmul %1, %4, %cst {dimension_numbers = #tpu.dot_dimension_numbers<[1], [0], [0], [1], [0, 0, 1, 1], [], []>} : vector<8x32xbf16>, vector<32x32xbf16>, vector<8x32xf32> -> vector<8x32xf32>
    %6 = arith.index_cast %arg1 : i32 to index
    %c0_4 = arith.constant 0 : index
    %c0_5 = arith.constant 0 : index
    %7 = vector.load %arg4[%6, %c0_4, %c0_5] : memref<1x32x32xbf16, #tpu.memory_space<vmem>>, vector<1x32x32xbf16>
    %8 = vector.shape_cast %7 : vector<1x32x32xbf16> to vector<32x32xbf16>
    %cst_6 = arith.constant dense<0.000000e+00> : vector<8x32xf32>
    %9 = tpu.matmul %1, %8, %cst_6 {dimension_numbers = #tpu.dot_dimension_numbers<[1], [0], [0], [1], [0, 0, 1, 1], [], []>} : vector<8x32xbf16>, vector<32x32xbf16>, vector<8x32xf32> -> vector<8x32xf32>
    %10 = arith.index_cast %arg1 : i32 to index
    %c0_7 = arith.constant 0 : index
    %c0_8 = arith.constant 0 : index
    %11 = vector.load %arg5[%10, %c0_7, %c0_8] : memref<1x32x32xbf16, #tpu.memory_space<vmem>>, vector<1x32x32xbf16>
    %12 = vector.shape_cast %11 : vector<1x32x32xbf16> to vector<32x32xbf16>
    %cst_9 = arith.constant dense<0.000000e+00> : vector<8x32xf32>
    %13 = tpu.matmul %1, %12, %cst_9 {dimension_numbers = #tpu.dot_dimension_numbers<[1], [0], [0], [1], [0, 0, 1, 1], [], []>} : vector<8x32xbf16>, vector<32x32xbf16>, vector<8x32xf32> -> vector<8x32xf32>
    %14 = arith.truncf %5 : vector<8x32xf32> to vector<8x32xbf16>
    %15 = arith.truncf %9 : vector<8x32xf32> to vector<8x32xbf16>
    %16 = arith.truncf %13 : vector<8x32xf32> to vector<8x32xbf16>
    %17 = vector.extract_strided_slice %14 {offsets = [0, 0], sizes = [8, 4], strides = [1, 1]} : vector<8x32xbf16> to vector<8x4xbf16>
    %18 = vector.extract_strided_slice %15 {offsets = [0, 0], sizes = [8, 4], strides = [1, 1]} : vector<8x32xbf16> to vector<8x4xbf16>
    %cst_10 = arith.constant dense<0.000000e+00> : vector<8x8xf32>
    %19 = tpu.matmul %17, %18, %cst_10 {dimension_numbers = #tpu.dot_dimension_numbers<[1], [1], [0], [0], [0, 0, 1, 0], [], []>} : vector<8x4xbf16>, vector<8x4xbf16>, vector<8x8xf32> -> vector<8x8xf32>
    %cst_11 = arith.constant dense<0xFF800000> : vector<8xf32>
    %20 = vector.multi_reduction <maximumf>, %19, %cst_11 [1] : vector<8x8xf32> to vector<8xf32>
    %21 = vector.shape_cast %20 : vector<8xf32> to vector<8x1xf32>
    %22 = vector.broadcast %21 : vector<8x1xf32> to vector<8x8xf32>
    %23 = arith.subf %19, %22 : vector<8x8xf32>
    %24 = math.exp %23 : vector<8x8xf32>
    %cst_12 = arith.constant dense<0.000000e+00> : vector<8xf32>
    %25 = vector.multi_reduction <add>, %24, %cst_12 [1] : vector<8x8xf32> to vector<8xf32>
    %26 = vector.shape_cast %25 : vector<8xf32> to vector<8x1xf32>
    %27 = tpu.reciprocal %26 {approx = true} : vector<8x1xf32> -> vector<8x1xf32>
    %28 = vector.broadcast %27 : vector<8x1xf32> to vector<8x8xf32>
    %29 = arith.mulf %24, %28 : vector<8x8xf32>
    %c0_13 = arith.constant 0 : index
    %c0_14 = arith.constant 0 : index
    %c0_15 = arith.constant 0 : index
    %c0_16 = arith.constant 0 : index
    %30 = vector.load %arg9[%c0_13, %c0_14, %c0_15, %c0_16] : memref<1x8x8x8xf32, #tpu.memory_space<vmem>>, vector<1x1x8x8xf32>
    %31 = vector.shape_cast %30 : vector<1x1x8x8xf32> to vector<8x8xf32>
    %32 = vector.shape_cast %29 : vector<8x8xf32> to vector<1x1x8x8xf32>
    tpu.vector_store %arg9[%c0_13, %c0_14, %c0_15, %c0_16], %32 {strides = array<i32>} : memref<1x8x8x8xf32, #tpu.memory_space<vmem>>, vector<1x1x8x8xf32>,
    %33 = arith.truncf %29 : vector<8x8xf32> to vector<8x8xbf16>
    %34 = vector.extract_strided_slice %16 {offsets = [0, 0], sizes = [8, 4], strides = [1, 1]} : vector<8x32xbf16> to vector<8x4xbf16>
    %cst_17 = arith.constant dense<0.000000e+00> : vector<8x4xf32>
    %35 = tpu.matmul %33, %34, %cst_17 {dimension_numbers = #tpu.dot_dimension_numbers<[1], [0], [0], [1], [0, 0, 1, 1], [], []>} : vector<8x8xbf16>, vector<8x4xbf16>, vector<8x4xf32> -> vector<8x4xf32>
    %36 = arith.truncf %35 : vector<8x4xf32> to vector<8x4xbf16>
    %c0_18 = arith.constant 0 : index
    %c0_19 = arith.constant 0 : index
    %37 = vector.load %arg11[%c0_18, %c0_19] : memref<8x32xbf16, #tpu.memory_space<vmem>>, vector<8x4xbf16>
    tpu.vector_store %arg11[%c0_18, %c0_19], %36 {strides = array<i32>} : memref<8x32xbf16, #tpu.memory_space<vmem>>, vector<8x4xbf16>,
    %38 = vector.extract_strided_slice %14 {offsets = [0, 4], sizes = [8, 4], strides = [1, 1]} : vector<8x32xbf16> to vector<8x4xbf16>
    %39 = vector.extract_strided_slice %15 {offsets = [0, 4], sizes = [8, 4], strides = [1, 1]} : vector<8x32xbf16> to vector<8x4xbf16>
    %cst_20 = arith.constant dense<0.000000e+00> : vector<8x8xf32>
    %40 = tpu.matmul %38, %39, %cst_20 {dimension_numbers = #tpu.dot_dimension_numbers<[1], [1], [0], [0], [0, 0, 1, 0], [], []>} : vector<8x4xbf16>, vector<8x4xbf16>, vector<8x8xf32> -> vector<8x8xf32>
    %cst_21 = arith.constant dense<0xFF800000> : vector<8xf32>
    %41 = vector.multi_reduction <maximumf>, %40, %cst_21 [1] : vector<8x8xf32> to vector<8xf32>
    %42 = vector.shape_cast %41 : vector<8xf32> to vector<8x1xf32>
    %43 = vector.broadcast %42 : vector<8x1xf32> to vector<8x8xf32>
    %44 = arith.subf %40, %43 : vector<8x8xf32>
    %45 = math.exp %44 : vector<8x8xf32>
    %cst_22 = arith.constant dense<0.000000e+00> : vector<8xf32>
    %46 = vector.multi_reduction <add>, %45, %cst_22 [1] : vector<8x8xf32> to vector<8xf32>
    %47 = vector.shape_cast %46 : vector<8xf32> to vector<8x1xf32>
    %48 = tpu.reciprocal %47 {approx = true} : vector<8x1xf32> -> vector<8x1xf32>
    %49 = vector.broadcast %48 : vector<8x1xf32> to vector<8x8xf32>
    %50 = arith.mulf %45, %49 : vector<8x8xf32>
    %c0_23 = arith.constant 0 : index
    %c1 = arith.constant 1 : index
    %c0_24 = arith.constant 0 : index
    %c0_25 = arith.constant 0 : index
    %51 = vector.load %arg9[%c0_23, %c1, %c0_24, %c0_25] : memref<1x8x8x8xf32, #tpu.memory_space<vmem>>, vector<1x1x8x8xf32>
    %52 = vector.shape_cast %51 : vector<1x1x8x8xf32> to vector<8x8xf32>
    %53 = vector.shape_cast %50 : vector<8x8xf32> to vector<1x1x8x8xf32>
    tpu.vector_store %arg9[%c0_23, %c1, %c0_24, %c0_25], %53 {strides = array<i32>} : memref<1x8x8x8xf32, #tpu.memory_space<vmem>>, vector<1x1x8x8xf32>,
    %54 = arith.truncf %50 : vector<8x8xf32> to vector<8x8xbf16>
    %55 = vector.extract_strided_slice %16 {offsets = [0, 4], sizes = [8, 4], strides = [1, 1]} : vector<8x32xbf16> to vector<8x4xbf16>
    %cst_26 = arith.constant dense<0.000000e+00> : vector<8x4xf32>
    %56 = tpu.matmul %54, %55, %cst_26 {dimension_numbers = #tpu.dot_dimension_numbers<[1], [0], [0], [1], [0, 0, 1, 1], [], []>} : vector<8x8xbf16>, vector<8x4xbf16>, vector<8x4xf32> -> vector<8x4xf32>
    %57 = arith.truncf %56 : vector<8x4xf32> to vector<8x4xbf16>
    %c0_27 = arith.constant 0 : index
    %c4 = arith.constant 4 : index
    %58 = vector.load %arg11[%c0_27, %c4] : memref<8x32xbf16, #tpu.memory_space<vmem>>, vector<8x4xbf16>
    tpu.vector_store %arg11[%c0_27, %c4], %57 {strides = array<i32>} : memref<8x32xbf16, #tpu.memory_space<vmem>>, vector<8x4xbf16>,
    %59 = vector.extract_strided_slice %14 {offsets = [0, 8], sizes = [8, 4], strides = [1, 1]} : vector<8x32xbf16> to vector<8x4xbf16>
    %60 = vector.extract_strided_slice %15 {offsets = [0, 8], sizes = [8, 4], strides = [1, 1]} : vector<8x32xbf16> to vector<8x4xbf16>
    %cst_28 = arith.constant dense<0.000000e+00> : vector<8x8xf32>
    %61 = tpu.matmul %59, %60, %cst_28 {dimension_numbers = #tpu.dot_dimension_numbers<[1], [1], [0], [0], [0, 0, 1, 0], [], []>} : vector<8x4xbf16>, vector<8x4xbf16>, vector<8x8xf32> -> vector<8x8xf32>
    %cst_29 = arith.constant dense<0xFF800000> : vector<8xf32>
    %62 = vector.multi_reduction <maximumf>, %61, %cst_29 [1] : vector<8x8xf32> to vector<8xf32>
    %63 = vector.shape_cast %62 : vector<8xf32> to vector<8x1xf32>
    %64 = vector.broadcast %63 : vector<8x1xf32> to vector<8x8xf32>
    %65 = arith.subf %61, %64 : vector<8x8xf32>
    %66 = math.exp %65 : vector<8x8xf32>
    %cst_30 = arith.constant dense<0.000000e+00> : vector<8xf32>
    %67 = vector.multi_reduction <add>, %66, %cst_30 [1] : vector<8x8xf32> to vector<8xf32>
    %68 = vector.shape_cast %67 : vector<8xf32> to vector<8x1xf32>
    %69 = tpu.reciprocal %68 {approx = true} : vector<8x1xf32> -> vector<8x1xf32>
    %70 = vector.broadcast %69 : vector<8x1xf32> to vector<8x8xf32>
    %71 = arith.mulf %66, %70 : vector<8x8xf32>
    %c0_31 = arith.constant 0 : index
    %c2 = arith.constant 2 : index
    %c0_32 = arith.constant 0 : index
    %c0_33 = arith.constant 0 : index
    %72 = vector.load %arg9[%c0_31, %c2, %c0_32, %c0_33] : memref<1x8x8x8xf32, #tpu.memory_space<vmem>>, vector<1x1x8x8xf32>
    %73 = vector.shape_cast %72 : vector<1x1x8x8xf32> to vector<8x8xf32>
    %74 = vector.shape_cast %71 : vector<8x8xf32> to vector<1x1x8x8xf32>
    tpu.vector_store %arg9[%c0_31, %c2, %c0_32, %c0_33], %74 {strides = array<i32>} : memref<1x8x8x8xf32, #tpu.memory_space<vmem>>, vector<1x1x8x8xf32>,
    %75 = arith.truncf %71 : vector<8x8xf32> to vector<8x8xbf16>
    %76 = vector.extract_strided_slice %16 {offsets = [0, 8], sizes = [8, 4], strides = [1, 1]} : vector<8x32xbf16> to vector<8x4xbf16>
    %cst_34 = arith.constant dense<0.000000e+00> : vector<8x4xf32>
    %77 = tpu.matmul %75, %76, %cst_34 {dimension_numbers = #tpu.dot_dimension_numbers<[1], [0], [0], [1], [0, 0, 1, 1], [], []>} : vector<8x8xbf16>, vector<8x4xbf16>, vector<8x4xf32> -> vector<8x4xf32>
    %78 = arith.truncf %77 : vector<8x4xf32> to vector<8x4xbf16>
    %c0_35 = arith.constant 0 : index
    %c8 = arith.constant 8 : index
    %79 = vector.load %arg11[%c0_35, %c8] : memref<8x32xbf16, #tpu.memory_space<vmem>>, vector<8x4xbf16>
    tpu.vector_store %arg11[%c0_35, %c8], %78 {strides = array<i32>} : memref<8x32xbf16, #tpu.memory_space<vmem>>, vector<8x4xbf16>,
    %80 = vector.extract_strided_slice %14 {offsets = [0, 12], sizes = [8, 4], strides = [1, 1]} : vector<8x32xbf16> to vector<8x4xbf16>
    %81 = vector.extract_strided_slice %15 {offsets = [0, 12], sizes = [8, 4], strides = [1, 1]} : vector<8x32xbf16> to vector<8x4xbf16>
    %cst_36 = arith.constant dense<0.000000e+00> : vector<8x8xf32>
    %82 = tpu.matmul %80, %81, %cst_36 {dimension_numbers = #tpu.dot_dimension_numbers<[1], [1], [0], [0], [0, 0, 1, 0], [], []>} : vector<8x4xbf16>, vector<8x4xbf16>, vector<8x8xf32> -> vector<8x8xf32>
    %cst_37 = arith.constant dense<0xFF800000> : vector<8xf32>
    %83 = vector.multi_reduction <maximumf>, %82, %cst_37 [1] : vector<8x8xf32> to vector<8xf32>
    %84 = vector.shape_cast %83 : vector<8xf32> to vector<8x1xf32>
    %85 = vector.broadcast %84 : vector<8x1xf32> to vector<8x8xf32>
    %86 = arith.subf %82, %85 : vector<8x8xf32>
    %87 = math.exp %86 : vector<8x8xf32>
    %cst_38 = arith.constant dense<0.000000e+00> : vector<8xf32>
    %88 = vector.multi_reduction <add>, %87, %cst_38 [1] : vector<8x8xf32> to vector<8xf32>
    %89 = vector.shape_cast %88 : vector<8xf32> to vector<8x1xf32>
    %90 = tpu.reciprocal %89 {approx = true} : vector<8x1xf32> -> vector<8x1xf32>
    %91 = vector.broadcast %90 : vector<8x1xf32> to vector<8x8xf32>
    %92 = arith.mulf %87, %91 : vector<8x8xf32>
    %c0_39 = arith.constant 0 : index
    %c3 = arith.constant 3 : index
    %c0_40 = arith.constant 0 : index
    %c0_41 = arith.constant 0 : index
    %93 = vector.load %arg9[%c0_39, %c3, %c0_40, %c0_41] : memref<1x8x8x8xf32, #tpu.memory_space<vmem>>, vector<1x1x8x8xf32>
    %94 = vector.shape_cast %93 : vector<1x1x8x8xf32> to vector<8x8xf32>
    %95 = vector.shape_cast %92 : vector<8x8xf32> to vector<1x1x8x8xf32>
    tpu.vector_store %arg9[%c0_39, %c3, %c0_40, %c0_41], %95 {strides = array<i32>} : memref<1x8x8x8xf32, #tpu.memory_space<vmem>>, vector<1x1x8x8xf32>,
    %96 = arith.truncf %92 : vector<8x8xf32> to vector<8x8xbf16>
    %97 = vector.extract_strided_slice %16 {offsets = [0, 12], sizes = [8, 4], strides = [1, 1]} : vector<8x32xbf16> to vector<8x4xbf16>
    %cst_42 = arith.constant dense<0.000000e+00> : vector<8x4xf32>
    %98 = tpu.matmul %96, %97, %cst_42 {dimension_numbers = #tpu.dot_dimension_numbers<[1], [0], [0], [1], [0, 0, 1, 1], [], []>} : vector<8x8xbf16>, vector<8x4xbf16>, vector<8x4xf32> -> vector<8x4xf32>
    %99 = arith.truncf %98 : vector<8x4xf32> to vector<8x4xbf16>
    %c0_43 = arith.constant 0 : index
    %c12 = arith.constant 12 : index
    %100 = vector.load %arg11[%c0_43, %c12] : memref<8x32xbf16, #tpu.memory_space<vmem>>, vector<8x4xbf16>
    tpu.vector_store %arg11[%c0_43, %c12], %99 {strides = array<i32>} : memref<8x32xbf16, #tpu.memory_space<vmem>>, vector<8x4xbf16>,
    %101 = vector.extract_strided_slice %14 {offsets = [0, 16], sizes = [8, 4], strides = [1, 1]} : vector<8x32xbf16> to vector<8x4xbf16>
    %102 = vector.extract_strided_slice %15 {offsets = [0, 16], sizes = [8, 4], strides = [1, 1]} : vector<8x32xbf16> to vector<8x4xbf16>
    %cst_44 = arith.constant dense<0.000000e+00> : vector<8x8xf32>
    %103 = tpu.matmul %101, %102, %cst_44 {dimension_numbers = #tpu.dot_dimension_numbers<[1], [1], [0], [0], [0, 0, 1, 0], [], []>} : vector<8x4xbf16>, vector<8x4xbf16>, vector<8x8xf32> -> vector<8x8xf32>
    %cst_45 = arith.constant dense<0xFF800000> : vector<8xf32>
    %104 = vector.multi_reduction <maximumf>, %103, %cst_45 [1] : vector<8x8xf32> to vector<8xf32>
    %105 = vector.shape_cast %104 : vector<8xf32> to vector<8x1xf32>
    %106 = vector.broadcast %105 : vector<8x1xf32> to vector<8x8xf32>
    %107 = arith.subf %103, %106 : vector<8x8xf32>
    %108 = math.exp %107 : vector<8x8xf32>
    %cst_46 = arith.constant dense<0.000000e+00> : vector<8xf32>
    %109 = vector.multi_reduction <add>, %108, %cst_46 [1] : vector<8x8xf32> to vector<8xf32>
    %110 = vector.shape_cast %109 : vector<8xf32> to vector<8x1xf32>
    %111 = tpu.reciprocal %110 {approx = true} : vector<8x1xf32> -> vector<8x1xf32>
    %112 = vector.broadcast %111 : vector<8x1xf32> to vector<8x8xf32>
    %113 = arith.mulf %108, %112 : vector<8x8xf32>
    %c0_47 = arith.constant 0 : index
    %c4_48 = arith.constant 4 : index
    %c0_49 = arith.constant 0 : index
    %c0_50 = arith.constant 0 : index
    %114 = vector.load %arg9[%c0_47, %c4_48, %c0_49, %c0_50] : memref<1x8x8x8xf32, #tpu.memory_space<vmem>>, vector<1x1x8x8xf32>
    %115 = vector.shape_cast %114 : vector<1x1x8x8xf32> to vector<8x8xf32>
    %116 = vector.shape_cast %113 : vector<8x8xf32> to vector<1x1x8x8xf32>
    tpu.vector_store %arg9[%c0_47, %c4_48, %c0_49, %c0_50], %116 {strides = array<i32>} : memref<1x8x8x8xf32, #tpu.memory_space<vmem>>, vector<1x1x8x8xf32>,
    %117 = arith.truncf %113 : vector<8x8xf32> to vector<8x8xbf16>
    %118 = vector.extract_strided_slice %16 {offsets = [0, 16], sizes = [8, 4], strides = [1, 1]} : vector<8x32xbf16> to vector<8x4xbf16>
    %cst_51 = arith.constant dense<0.000000e+00> : vector<8x4xf32>
    %119 = tpu.matmul %117, %118, %cst_51 {dimension_numbers = #tpu.dot_dimension_numbers<[1], [0], [0], [1], [0, 0, 1, 1], [], []>} : vector<8x8xbf16>, vector<8x4xbf16>, vector<8x4xf32> -> vector<8x4xf32>
    %120 = arith.truncf %119 : vector<8x4xf32> to vector<8x4xbf16>
    %c0_52 = arith.constant 0 : index
    %c16 = arith.constant 16 : index
    %121 = vector.load %arg11[%c0_52, %c16] : memref<8x32xbf16, #tpu.memory_space<vmem>>, vector<8x4xbf16>
    tpu.vector_store %arg11[%c0_52, %c16], %120 {strides = array<i32>} : memref<8x32xbf16, #tpu.memory_space<vmem>>, vector<8x4xbf16>,
    %122 = vector.extract_strided_slice %14 {offsets = [0, 20], sizes = [8, 4], strides = [1, 1]} : vector<8x32xbf16> to vector<8x4xbf16>
    %123 = vector.extract_strided_slice %15 {offsets = [0, 20], sizes = [8, 4], strides = [1, 1]} : vector<8x32xbf16> to vector<8x4xbf16>
    %cst_53 = arith.constant dense<0.000000e+00> : vector<8x8xf32>
    %124 = tpu.matmul %122, %123, %cst_53 {dimension_numbers = #tpu.dot_dimension_numbers<[1], [1], [0], [0], [0, 0, 1, 0], [], []>} : vector<8x4xbf16>, vector<8x4xbf16>, vector<8x8xf32> -> vector<8x8xf32>
    %cst_54 = arith.constant dense<0xFF800000> : vector<8xf32>
    %125 = vector.multi_reduction <maximumf>, %124, %cst_54 [1] : vector<8x8xf32> to vector<8xf32>
    %126 = vector.shape_cast %125 : vector<8xf32> to vector<8x1xf32>
    %127 = vector.broadcast %126 : vector<8x1xf32> to vector<8x8xf32>
    %128 = arith.subf %124, %127 : vector<8x8xf32>
    %129 = math.exp %128 : vector<8x8xf32>
    %cst_55 = arith.constant dense<0.000000e+00> : vector<8xf32>
    %130 = vector.multi_reduction <add>, %129, %cst_55 [1] : vector<8x8xf32> to vector<8xf32>
    %131 = vector.shape_cast %130 : vector<8xf32> to vector<8x1xf32>
    %132 = tpu.reciprocal %131 {approx = true} : vector<8x1xf32> -> vector<8x1xf32>
    %133 = vector.broadcast %132 : vector<8x1xf32> to vector<8x8xf32>
    %134 = arith.mulf %129, %133 : vector<8x8xf32>
    %c0_56 = arith.constant 0 : index
    %c5 = arith.constant 5 : index
    %c0_57 = arith.constant 0 : index
    %c0_58 = arith.constant 0 : index
    %135 = vector.load %arg9[%c0_56, %c5, %c0_57, %c0_58] : memref<1x8x8x8xf32, #tpu.memory_space<vmem>>, vector<1x1x8x8xf32>
    %136 = vector.shape_cast %135 : vector<1x1x8x8xf32> to vector<8x8xf32>
    %137 = vector.shape_cast %134 : vector<8x8xf32> to vector<1x1x8x8xf32>
    tpu.vector_store %arg9[%c0_56, %c5, %c0_57, %c0_58], %137 {strides = array<i32>} : memref<1x8x8x8xf32, #tpu.memory_space<vmem>>, vector<1x1x8x8xf32>,
    %138 = arith.truncf %134 : vector<8x8xf32> to vector<8x8xbf16>
    %139 = vector.extract_strided_slice %16 {offsets = [0, 20], sizes = [8, 4], strides = [1, 1]} : vector<8x32xbf16> to vector<8x4xbf16>
    %cst_59 = arith.constant dense<0.000000e+00> : vector<8x4xf32>
    %140 = tpu.matmul %138, %139, %cst_59 {dimension_numbers = #tpu.dot_dimension_numbers<[1], [0], [0], [1], [0, 0, 1, 1], [], []>} : vector<8x8xbf16>, vector<8x4xbf16>, vector<8x4xf32> -> vector<8x4xf32>
    %141 = arith.truncf %140 : vector<8x4xf32> to vector<8x4xbf16>
    %c0_60 = arith.constant 0 : index
    %c20 = arith.constant 20 : index
    %142 = vector.load %arg11[%c0_60, %c20] : memref<8x32xbf16, #tpu.memory_space<vmem>>, vector<8x4xbf16>
    tpu.vector_store %arg11[%c0_60, %c20], %141 {strides = array<i32>} : memref<8x32xbf16, #tpu.memory_space<vmem>>, vector<8x4xbf16>,
    %143 = vector.extract_strided_slice %14 {offsets = [0, 24], sizes = [8, 4], strides = [1, 1]} : vector<8x32xbf16> to vector<8x4xbf16>
    %144 = vector.extract_strided_slice %15 {offsets = [0, 24], sizes = [8, 4], strides = [1, 1]} : vector<8x32xbf16> to vector<8x4xbf16>
    %cst_61 = arith.constant dense<0.000000e+00> : vector<8x8xf32>
    %145 = tpu.matmul %143, %144, %cst_61 {dimension_numbers = #tpu.dot_dimension_numbers<[1], [1], [0], [0], [0, 0, 1, 0], [], []>} : vector<8x4xbf16>, vector<8x4xbf16>, vector<8x8xf32> -> vector<8x8xf32>
    %cst_62 = arith.constant dense<0xFF800000> : vector<8xf32>
    %146 = vector.multi_reduction <maximumf>, %145, %cst_62 [1] : vector<8x8xf32> to vector<8xf32>
    %147 = vector.shape_cast %146 : vector<8xf32> to vector<8x1xf32>
    %148 = vector.broadcast %147 : vector<8x1xf32> to vector<8x8xf32>
    %149 = arith.subf %145, %148 : vector<8x8xf32>
    %150 = math.exp %149 : vector<8x8xf32>
    %cst_63 = arith.constant dense<0.000000e+00> : vector<8xf32>
    %151 = vector.multi_reduction <add>, %150, %cst_63 [1] : vector<8x8xf32> to vector<8xf32>
    %152 = vector.shape_cast %151 : vector<8xf32> to vector<8x1xf32>
    %153 = tpu.reciprocal %152 {approx = true} : vector<8x1xf32> -> vector<8x1xf32>
    %154 = vector.broadcast %153 : vector<8x1xf32> to vector<8x8xf32>
    %155 = arith.mulf %150, %154 : vector<8x8xf32>
    %c0_64 = arith.constant 0 : index
    %c6 = arith.constant 6 : index
    %c0_65 = arith.constant 0 : index
    %c0_66 = arith.constant 0 : index
    %156 = vector.load %arg9[%c0_64, %c6, %c0_65, %c0_66] : memref<1x8x8x8xf32, #tpu.memory_space<vmem>>, vector<1x1x8x8xf32>
    %157 = vector.shape_cast %156 : vector<1x1x8x8xf32> to vector<8x8xf32>
    %158 = vector.shape_cast %155 : vector<8x8xf32> to vector<1x1x8x8xf32>
    tpu.vector_store %arg9[%c0_64, %c6, %c0_65, %c0_66], %158 {strides = array<i32>} : memref<1x8x8x8xf32, #tpu.memory_space<vmem>>, vector<1x1x8x8xf32>,
    %159 = arith.truncf %155 : vector<8x8xf32> to vector<8x8xbf16>
    %160 = vector.extract_strided_slice %16 {offsets = [0, 24], sizes = [8, 4], strides = [1, 1]} : vector<8x32xbf16> to vector<8x4xbf16>
    %cst_67 = arith.constant dense<0.000000e+00> : vector<8x4xf32>
    %161 = tpu.matmul %159, %160, %cst_67 {dimension_numbers = #tpu.dot_dimension_numbers<[1], [0], [0], [1], [0, 0, 1, 1], [], []>} : vector<8x8xbf16>, vector<8x4xbf16>, vector<8x4xf32> -> vector<8x4xf32>
    %162 = arith.truncf %161 : vector<8x4xf32> to vector<8x4xbf16>
    %c0_68 = arith.constant 0 : index
    %c24 = arith.constant 24 : index
    %163 = vector.load %arg11[%c0_68, %c24] : memref<8x32xbf16, #tpu.memory_space<vmem>>, vector<8x4xbf16>
    tpu.vector_store %arg11[%c0_68, %c24], %162 {strides = array<i32>} : memref<8x32xbf16, #tpu.memory_space<vmem>>, vector<8x4xbf16>,
    %164 = vector.extract_strided_slice %14 {offsets = [0, 28], sizes = [8, 4], strides = [1, 1]} : vector<8x32xbf16> to vector<8x4xbf16>
    %165 = vector.extract_strided_slice %15 {offsets = [0, 28], sizes = [8, 4], strides = [1, 1]} : vector<8x32xbf16> to vector<8x4xbf16>
    %cst_69 = arith.constant dense<0.000000e+00> : vector<8x8xf32>
    %166 = tpu.matmul %164, %165, %cst_69 {dimension_numbers = #tpu.dot_dimension_numbers<[1], [1], [0], [0], [0, 0, 1, 0], [], []>} : vector<8x4xbf16>, vector<8x4xbf16>, vector<8x8xf32> -> vector<8x8xf32>
    %cst_70 = arith.constant dense<0xFF800000> : vector<8xf32>
    %167 = vector.multi_reduction <maximumf>, %166, %cst_70 [1] : vector<8x8xf32> to vector<8xf32>
    %168 = vector.shape_cast %167 : vector<8xf32> to vector<8x1xf32>
    %169 = vector.broadcast %168 : vector<8x1xf32> to vector<8x8xf32>
    %170 = arith.subf %166, %169 : vector<8x8xf32>
    %171 = math.exp %170 : vector<8x8xf32>
    %cst_71 = arith.constant dense<0.000000e+00> : vector<8xf32>
    %172 = vector.multi_reduction <add>, %171, %cst_71 [1] : vector<8x8xf32> to vector<8xf32>
    %173 = vector.shape_cast %172 : vector<8xf32> to vector<8x1xf32>
    %174 = tpu.reciprocal %173 {approx = true} : vector<8x1xf32> -> vector<8x1xf32>
    %175 = vector.broadcast %174 : vector<8x1xf32> to vector<8x8xf32>
    %176 = arith.mulf %171, %175 : vector<8x8xf32>
    %c0_72 = arith.constant 0 : index
    %c7 = arith.constant 7 : index
    %c0_73 = arith.constant 0 : index
    %c0_74 = arith.constant 0 : index
    %177 = vector.load %arg9[%c0_72, %c7, %c0_73, %c0_74] : memref<1x8x8x8xf32, #tpu.memory_space<vmem>>, vector<1x1x8x8xf32>
    %178 = vector.shape_cast %177 : vector<1x1x8x8xf32> to vector<8x8xf32>
    %179 = vector.shape_cast %176 : vector<8x8xf32> to vector<1x1x8x8xf32>
    tpu.vector_store %arg9[%c0_72, %c7, %c0_73, %c0_74], %179 {strides = array<i32>} : memref<1x8x8x8xf32, #tpu.memory_space<vmem>>, vector<1x1x8x8xf32>,
    %180 = arith.truncf %176 : vector<8x8xf32> to vector<8x8xbf16>
    %181 = vector.extract_strided_slice %16 {offsets = [0, 28], sizes = [8, 4], strides = [1, 1]} : vector<8x32xbf16> to vector<8x4xbf16>
    %cst_75 = arith.constant dense<0.000000e+00> : vector<8x4xf32>
    %182 = tpu.matmul %180, %181, %cst_75 {dimension_numbers = #tpu.dot_dimension_numbers<[1], [0], [0], [1], [0, 0, 1, 1], [], []>} : vector<8x8xbf16>, vector<8x4xbf16>, vector<8x4xf32> -> vector<8x4xf32>
    %183 = arith.truncf %182 : vector<8x4xf32> to vector<8x4xbf16>
    %c0_76 = arith.constant 0 : index
    %c28 = arith.constant 28 : index
    %184 = vector.load %arg11[%c0_76, %c28] : memref<8x32xbf16, #tpu.memory_space<vmem>>, vector<8x4xbf16>
    tpu.vector_store %arg11[%c0_76, %c28], %183 {strides = array<i32>} : memref<8x32xbf16, #tpu.memory_space<vmem>>, vector<8x4xbf16>,
    %c0_77 = arith.constant 0 : index
    %c0_78 = arith.constant 0 : index
    %185 = vector.load %arg11[%c0_77, %c0_78] : memref<8x32xbf16, #tpu.memory_space<vmem>>, vector<8x32xbf16>
    %186 = arith.index_cast %arg1 : i32 to index
    %c0_79 = arith.constant 0 : index
    %c0_80 = arith.constant 0 : index
    %187 = vector.load %arg6[%186, %c0_79, %c0_80] : memref<1x32x32xbf16, #tpu.memory_space<vmem>>, vector<1x32x32xbf16>
    %188 = vector.shape_cast %187 : vector<1x32x32xbf16> to vector<32x32xbf16>
    %cst_81 = arith.constant dense<0.000000e+00> : vector<8x32xf32>
    %189 = tpu.matmul %185, %188, %cst_81 {dimension_numbers = #tpu.dot_dimension_numbers<[1], [0], [0], [1], [0, 0, 1, 1], [], []>} : vector<8x32xbf16>, vector<32x32xbf16>, vector<8x32xf32> -> vector<8x32xf32>
    %c0_i32 = arith.constant 0 : i32
    %190 = arith.cmpi eq, %arg1, %c0_i32 : i32
    %191 = arith.extui %190 : i1 to i32
    %c0_i32_82 = arith.constant 0 : i32
    %192 = arith.cmpi ne, %191, %c0_i32_82 : i32
    scf.if %192 {
      %c0_89 = arith.constant 0 : index
      %c0_90 = arith.constant 0 : index
      %199 = vector.load %arg7[%c0_89, %c0_90] : memref<1x32xf32, #tpu.memory_space<vmem>>, vector<1x32xf32>
      %200 = vector.shape_cast %199 : vector<1x32xf32> to vector<1x32xf32>
      %201 = vector.broadcast %200 : vector<1x32xf32> to vector<8x32xf32>
      %c0_91 = arith.constant 0 : index
      %c0_92 = arith.constant 0 : index
      %202 = vector.load %arg10[%c0_91, %c0_92] : memref<8x32xf32, #tpu.memory_space<vmem>>, vector<8x32xf32>
      tpu.vector_store %arg10[%c0_91, %c0_92], %201 {strides = array<i32>} : memref<8x32xf32, #tpu.memory_space<vmem>>, vector<8x32xf32>,
    } else {
    }
    %c0_83 = arith.constant 0 : index
    %c0_84 = arith.constant 0 : index
    %193 = vector.load %arg10[%c0_83, %c0_84] : memref<8x32xf32, #tpu.memory_space<vmem>>, vector<8x32xf32>
    %194 = arith.addf %193, %189 : vector<8x32xf32>
    %c0_85 = arith.constant 0 : index
    %c0_86 = arith.constant 0 : index
    %195 = vector.load %arg10[%c0_85, %c0_86] : memref<8x32xf32, #tpu.memory_space<vmem>>, vector<8x32xf32>
    tpu.vector_store %arg10[%c0_85, %c0_86], %194 {strides = array<i32>} : memref<8x32xf32, #tpu.memory_space<vmem>>, vector<8x32xf32>,
    %c0_i32_87 = arith.constant 0 : i32
    %196 = arith.cmpi eq, %arg1, %c0_i32_87 : i32
    %197 = arith.extui %196 : i1 to i32
    %c0_i32_88 = arith.constant 0 : i32
    %198 = arith.cmpi ne, %197, %c0_i32_88 : i32
    scf.if %198 {
      %c0_89 = arith.constant 0 : index
      %c0_90 = arith.constant 0 : index
      %199 = vector.load %arg10[%c0_89, %c0_90] : memref<8x32xf32, #tpu.memory_space<vmem>>, vector<8x32xf32>
      %c0_91 = arith.constant 0 : index
      %c0_92 = arith.constant 0 : index
      %c0_93 = arith.constant 0 : index
      %200 = vector.load %arg8[%c0_91, %c0_92, %c0_93] : memref<1x8x32xf32, #tpu.memory_space<vmem>>, vector<1x8x32xf32>
      %201 = vector.shape_cast %200 : vector<1x8x32xf32> to vector<8x32xf32>
      %202 = vector.shape_cast %199 : vector<8x32xf32> to vector<1x8x32xf32>
      tpu.vector_store %arg8[%c0_91, %c0_92, %c0_93], %202 {strides = array<i32>} : memref<1x8x32xf32, #tpu.memory_space<vmem>>, vector<1x8x32xf32>,
    } else {
    }
    return
  }
  func.func @transform_0(%arg0: i32, %arg1: i32) -> (i32, i32, i32) {
    %c0_i32 = arith.constant 0 : i32
    %c0_i32_0 = arith.constant 0 : i32
    %c0_i32_1 = arith.constant 0 : i32
    return %arg0, %c0_i32, %c0_i32_0 : i32, i32, i32
  }
  func.func @transform_1(%arg0: i32, %arg1: i32) -> (i32, i32, i32) {
    %c0_i32 = arith.constant 0 : i32
    %c0_i32_0 = arith.constant 0 : i32
    %c0_i32_1 = arith.constant 0 : i32
    %c0_i32_2 = arith.constant 0 : i32
    return %c0_i32, %c0_i32_0, %c0_i32_1 : i32, i32, i32
  }
  func.func @transform_2(%arg0: i32, %arg1: i32) -> (i32, i32, i32) {
    %c0_i32 = arith.constant 0 : i32
    %c0_i32_0 = arith.constant 0 : i32
    %c0_i32_1 = arith.constant 0 : i32
    %c0_i32_2 = arith.constant 0 : i32
    return %c0_i32, %c0_i32_0, %c0_i32_1 : i32, i32, i32
  }
  func.func @transform_3(%arg0: i32, %arg1: i32) -> (i32, i32, i32) {
    %c0_i32 = arith.constant 0 : i32
    %c0_i32_0 = arith.constant 0 : i32
    %c0_i32_1 = arith.constant 0 : i32
    %c0_i32_2 = arith.constant 0 : i32
    return %c0_i32, %c0_i32_0, %c0_i32_1 : i32, i32, i32
  }
  func.func @transform_4(%arg0: i32, %arg1: i32) -> (i32, i32, i32) {
    %c0_i32 = arith.constant 0 : i32
    %c0_i32_0 = arith.constant 0 : i32
    %c0_i32_1 = arith.constant 0 : i32
    %c0_i32_2 = arith.constant 0 : i32
    return %c0_i32, %c0_i32_0, %c0_i32_1 : i32, i32, i32
  }
  func.func @transform_5(%arg0: i32, %arg1: i32) -> (i32, i32) {
    %c0_i32 = arith.constant 0 : i32
    %c0_i32_0 = arith.constant 0 : i32
    %c0_i32_1 = arith.constant 0 : i32
    return %c0_i32, %c0_i32_0 : i32, i32
  }
  func.func @transform_6(%arg0: i32, %arg1: i32) -> (i32, i32, i32) {
    %c0_i32 = arith.constant 0 : i32
    %c0_i32_0 = arith.constant 0 : i32
    %c0_i32_1 = arith.constant 0 : i32
    return %arg0, %c0_i32, %c0_i32_0 : i32, i32, i32
  }
  func.func @transform_7(%arg0: i32, %arg1: i32) -> (i32, i32, i32, i32) {
    %c0_i32 = arith.constant 0 : i32
    %c0_i32_0 = arith.constant 0 : i32
    %c0_i32_1 = arith.constant 0 : i32
    return %arg0, %arg1, %c0_i32, %c0_i32_0 : i32, i32, i32, i32
  }
}

</mosaic_0001>

<llo_original>
// kernel: tpu_custom_call.1
$region0: #{tpu_custom_call.1}
  #allocation0 [shape = 'u32[]', space=smem, size = 0x4, offset = 0x4, fixed_abs, tag = 'smem constant byte address 0x4 - core index']
  #allocation1 [shape = 'u32[72,128]{1,0:T(1,128)}', space=vmem, size = 0x9000, scoped, tag = 'internal scratch']
  #allocation2 [shape = 'f32[8,32]{1,0:T(8,128)}', space=vmem, size = 0x1000, scoped, tag = 'scratch operand']
  #allocation3 [shape = 'bf16[8,32]{1,0:T(8,128)(2,1)}', space=vmem, size = 0x800, scoped, tag = 'scratch operand']
  %s0 = inlined_call_operand.hbm [shape: bf16[2,8,32], index: 0, kind: input, shape index: {}]
  %s1 = inlined_call_operand.hbm [shape: bf16[1,32,32], index: 1, kind: input, shape index: {}]
  %s2 = inlined_call_operand.hbm [shape: bf16[1,32,32], index: 2, kind: input, shape index: {}]
  %s3 = inlined_call_operand.hbm [shape: bf16[1,32,32], index: 3, kind: input, shape index: {}]
  %s4 = inlined_call_operand.hbm [shape: bf16[1,32,32], index: 4, kind: input, shape index: {}]
  %s5 = inlined_call_operand.vmem [shape: f32[1,32], index: 5, kind: input, shape index: {}]
  %s6 = inlined_call_operand.hbm [shape: f32[2,8,32], index: 6, kind: output, shape index: {0}]
  %s7 = inlined_call_operand.hbm [shape: f32[2,8,8,8], index: 7, kind: output, shape index: {1}]
  %8 = xla_tuple %s6, %s7
  %s9 = sld [smem:[#allocation0]]
  $region93: #{tpu_custom_call.1} parent=0
    _
  %s11 = ssub.s32 1, %s9
  %s12 = scalar_select 0, %s11, %s9
  $region1: #{tpu_custom_call.1} parent=0
    #allocation4 [shape = 'u8[4096]{0}', space=vmem, size = 0x1000, scoped, tag = 'input window, operand 0']
    #allocation5 [shape = 's32[2]{0}', space=sflag, size = 0x8, scoped, tag = 'scoped memory for tpu_custom_call.1']
    #allocation6 [shape = 's32[2]{0}', space=sflag, size = 0x8, scoped, tag = 'scoped memory for tpu_custom_call.1']
    #allocation7 [shape = 'u8[8192]{0}', space=vmem, size = 0x2000, scoped, tag = 'input window, operand 1, single buffered']
    #allocation8 [shape = 's32[1]{0}', space=sflag, size = 0x4, scoped, tag = 'scoped memory for tpu_custom_call.1']
    #allocation9 [shape = 'u8[8192]{0}', space=vmem, size = 0x2000, scoped, tag = 'input window, operand 2, single buffered']
    #allocation10 [shape = 'u8[8192]{0}', space=vmem, size = 0x2000, scoped, tag = 'input window, operand 3, single buffered']
    #allocation11 [shape = 's32[1]{0}', space=sflag, size = 0x4, scoped, tag = 'scoped memory for tpu_custom_call.1']
    #allocation12 [shape = 'u8[8192]{0}', space=vmem, size = 0x2000, scoped, tag = 'input window, operand 4, single buffered']
    #allocation13 [shape = 'u8[8192]{0}', space=vmem, size = 0x2000, scoped, tag = 'output window, operand 0']
    #allocation14 [shape = 'u8[65536]{0}', space=vmem, size = 0x10000, scoped, tag = 'output window, operand 1']
    #allocation15 [shape = 's32[2]{0}', space=sflag, size = 0x8, scoped, tag = 'scoped memory for tpu_custom_call.1']
    %13 = vsyncpa [#allocation5], 0
    %s14 = scalar_lea.sflag [#allocation5], 1
    %15 = vsyncpa %s14, 0
    %16 = vsyncpa [#allocation8], 0
    %17 = vsyncpa [#allocation11], 0
    %18 = vsyncpa [#allocation6], 0
    %s19 = scalar_lea.sflag [#allocation6], 1
    %20 = vsyncpa %s19, 0
    %21 = vsyncpa [#allocation15], 0
    %s22 = scalar_lea.sflag [#allocation15], 1
    %23 = vsyncpa %s22, 0
    loop: start=0, step=1, limit=4
    $region2: #{tpu_custom_call.1} parent=1 // loop_pre_header
      _
    $region3: #{tpu_custom_call.1} parent=1 // loop_header
      %s25 = sphi 0, %s29
      %p26 = scmp.ge.s32.totalorder %s25, 4
      %s32 = sphi 0, %s44
      %s33 = sphi 0, %s40
      %s34 = sphi 0, %s32
      %s35 = sphi 0, %s33
      %s36 = sphi 0, %s34
      %s37 = sphi 0, %s35
      %s47 = sphi 0, %s49
      %s50 = sphi 0, %s47
      %s51 = sphi 0, %s50
      %s67 = sphi 0, %s51
      %s71 = sphi 0, %s71
      %s73 = sphi 0, %s71
      %s74 = sphi 0, %s73
      %s88 = sphi 0, %s74
      %s92 = sphi 0, %s92
      %s94 = sphi 0, %s92
      %s95 = sphi 0, %s94
      %s109 = sphi 0, %s95
      %s113 = sphi 0, %s113
      %s115 = sphi 0, %s113
      %s116 = sphi 0, %s115
      %s130 = sphi 0, %s116
      %s134 = sphi 0, %s134
      %s136 = sphi 0, %s134
      %s137 = sphi 0, %s136
      %s151 = sphi 0, %s137
      %s155 = sphi 0, %s155
      %s157 = sphi 0, %s155
      %s158 = sphi 0, %s157
      %s172 = sphi 0, %s158
      %s178 = sphi 0, %s180
      %s181 = sphi 0, %s178
      %s182 = sphi 0, %s181
      %s198 = sphi 0, %s182
      %s206 = sphi 0, %s208
      %s209 = sphi 0, %s206
      %s210 = sphi 0, %s209
      %s226 = sphi 0, %s210
    $region4: #{tpu_custom_call.1} parent=1 // loop_header_branch
      %28 = sbr.rel (%p26) target = $region8
    $region5: #{tpu_custom_call.1} parent=1 // loop_body
      %s30 = ssub.s32 %s25, 1
      %s31 = ssub.s32 %s25, 2
      %s38 = sadd.s32 1, %s33
      %p39 = scmp.ge.s32.totalorder %s38, 1
      %s40 = scalar_select %p39, 0, %s38
      %s41 = sadd.s32 1, %s32
      %s42 = scalar_select %p39, %s41, %s32
      %p43 = scmp.ge.s32.totalorder %s42, 2
      %s44 = scalar_select %p43, 0, %s42
      %s45 = ssub.s32 %s32, %s44
      %p46 = scmp.eq.s32.totalorder %s45, 0
      %s48 = sadd.s32 %s47, 1
      %s49 = scalar_select %p46, %s47, %s48
      %p52 = pneg %p46
      %p53 = scmp.eq.s32.totalorder %s25, 1
      %p54 = por %p52, %p53
      %p55 = scmp.ne.s32.totalorder %s47, %s50
      %p56 = scmp.eq.s32.totalorder %s25, 0
      %p57 = por %p55, %p56
      %p58 = scmp.ne.s32.totalorder %s47, %s50
      %p59 = scmp.eq.s32.totalorder %s30, 1
      %p60 = por %p58, %p59
      %p61 = scmp.ne.s32.totalorder %s50, %s51
      %p62 = scmp.eq.s32.totalorder %s30, 0
      %p63 = por %p61, %p62
      %p64 = scmp.ne.s32.totalorder %s50, %s51
      %p65 = scmp.eq.s32.totalorder %s31, 1
      %p66 = por %p64, %p65
      %p68 = scmp.ne.s32.totalorder %s51, %s67
      %p69 = scmp.eq.s32.totalorder %s31, 0
      %p70 = por %p68, %p69
      %s72 = sadd.s32 %s71, 1
      %p75 = scmp.eq.s32.totalorder %s25, 1
      %p76 = scmp.ne.s32.totalorder %s71, %s73
      %p77 = scmp.eq.s32.totalorder %s25, 0
      %p78 = por %p76, %p77
      %p79 = scmp.ne.s32.totalorder %s71, %s73
      %p80 = scmp.eq.s32.totalorder %s30, 1
      %p81 = por %p79, %p80
      %p82 = scmp.ne.s32.totalorder %s73, %s74
      %p83 = scmp.eq.s32.totalorder %s30, 0
      %p84 = por %p82, %p83
      %p85 = scmp.ne.s32.totalorder %s73, %s74
      %p86 = scmp.eq.s32.totalorder %s31, 1
      %p87 = por %p85, %p86
      %p89 = scmp.ne.s32.totalorder %s74, %s88
      %p90 = scmp.eq.s32.totalorder %s31, 0
      %p91 = por %p89, %p90
      %s93 = sadd.s32 %s92, 1
      %p96 = scmp.eq.s32.totalorder %s25, 1
      %p97 = scmp.ne.s32.totalorder %s92, %s94
      %p98 = scmp.eq.s32.totalorder %s25, 0
      %p99 = por %p97, %p98
      %p100 = scmp.ne.s32.totalorder %s92, %s94
      %p101 = scmp.eq.s32.totalorder %s30, 1
      %p102 = por %p100, %p101
      %p103 = scmp.ne.s32.totalorder %s94, %s95
      %p104 = scmp.eq.s32.totalorder %s30, 0
      %p105 = por %p103, %p104
      %p106 = scmp.ne.s32.totalorder %s94, %s95
      %p107 = scmp.eq.s32.totalorder %s31, 1
      %p108 = por %p106, %p107
      %p110 = scmp.ne.s32.totalorder %s95, %s109
      %p111 = scmp.eq.s32.totalorder %s31, 0
      %p112 = por %p110, %p111
      %s114 = sadd.s32 %s113, 1
      %p117 = scmp.eq.s32.totalorder %s25, 1
      %p118 = scmp.ne.s32.totalorder %s113, %s115
      %p119 = scmp.eq.s32.totalorder %s25, 0
      %p120 = por %p118, %p119
      %p121 = scmp.ne.s32.totalorder %s113, %s115
      %p122 = scmp.eq.s32.totalorder %s30, 1
      %p123 = por %p121, %p122
      %p124 = scmp.ne.s32.totalorder %s115, %s116
      %p125 = scmp.eq.s32.totalorder %s30, 0
      %p126 = por %p124, %p125
      %p127 = scmp.ne.s32.totalorder %s115, %s116
      %p128 = scmp.eq.s32.totalorder %s31, 1
      %p129 = por %p127, %p128
      %p131 = scmp.ne.s32.totalorder %s116, %s130
      %p132 = scmp.eq.s32.totalorder %s31, 0
      %p133 = por %p131, %p132
      %s135 = sadd.s32 %s134, 1
      %p138 = scmp.eq.s32.totalorder %s25, 1
      %p139 = scmp.ne.s32.totalorder %s134, %s136
      %p140 = scmp.eq.s32.totalorder %s25, 0
      %p141 = por %p139, %p140
      %p142 = scmp.ne.s32.totalorder %s134, %s136
      %p143 = scmp.eq.s32.totalorder %s30, 1
      %p144 = por %p142, %p143
      %p145 = scmp.ne.s32.totalorder %s136, %s137
      %p146 = scmp.eq.s32.totalorder %s30, 0
      %p147 = por %p145, %p146
      %p148 = scmp.ne.s32.totalorder %s136, %s137
      %p149 = scmp.eq.s32.totalorder %s31, 1
      %p150 = por %p148, %p149
      %p152 = scmp.ne.s32.totalorder %s137, %s151
      %p153 = scmp.eq.s32.totalorder %s31, 0
      %p154 = por %p152, %p153
      %s156 = sadd.s32 %s155, 1
      %p159 = scmp.eq.s32.totalorder %s25, 1
      %p160 = scmp.ne.s32.totalorder %s155, %s157
      %p161 = scmp.eq.s32.totalorder %s25, 0
      %p162 = por %p160, %p161
      %p163 = scmp.ne.s32.totalorder %s155, %s157
      %p164 = scmp.eq.s32.totalorder %s30, 1
      %p165 = por %p163, %p164
      %p166 = scmp.ne.s32.totalorder %s157, %s158
      %p167 = scmp.eq.s32.totalorder %s30, 0
      %p168 = por %p166, %p167
      %p169 = scmp.ne.s32.totalorder %s157, %s158
      %p170 = scmp.eq.s32.totalorder %s31, 1
      %p171 = por %p169, %p170
      %p173 = scmp.ne.s32.totalorder %s158, %s172
      %p174 = scmp.eq.s32.totalorder %s31, 0
      %p175 = por %p173, %p174
      %s176 = ssub.s32 %s32, %s44
      %p177 = scmp.eq.s32.totalorder %s176, 0
      %s179 = sadd.s32 %s178, 1
      %s180 = scalar_select %p177, %s178, %s179
      %p183 = pneg %p177
      %p184 = scmp.eq.s32.totalorder %s25, 1
      %p185 = por %p183, %p184
      %p186 = scmp.ne.s32.totalorder %s178, %s181
      %p187 = scmp.eq.s32.totalorder %s25, 0
      %p188 = por %p186, %p187
      %p189 = scmp.ne.s32.totalorder %s178, %s181
      %p190 = scmp.eq.s32.totalorder %s30, 1
      %p191 = por %p189, %p190
      %p192 = scmp.ne.s32.totalorder %s181, %s182
      %p193 = scmp.eq.s32.totalorder %s30, 0
      %p194 = por %p192, %p193
      %p195 = scmp.ne.s32.totalorder %s181, %s182
      %p196 = scmp.eq.s32.totalorder %s31, 1
      %p197 = por %p195, %p196
      %p199 = scmp.ne.s32.totalorder %s182, %s198
      %p200 = scmp.eq.s32.totalorder %s31, 0
      %p201 = por %p199, %p200
      %s202 = ssub.s32 %s32, %s44
      %s203 = ssub.s32 %s33, %s40
      %s204 = sor.u32 %s202, %s203
      %p205 = scmp.eq.s32.totalorder %s204, 0
      %s207 = sadd.s32 %s206, 1
      %s208 = scalar_select %p205, %s206, %s207
      %p211 = pneg %p205
      %p212 = scmp.eq.s32.totalorder %s25, 1
      %p213 = por %p211, %p212
      %p214 = scmp.ne.s32.totalorder %s206, %s209
      %p215 = scmp.eq.s32.totalorder %s25, 0
      %p216 = por %p214, %p215
      %p217 = scmp.ne.s32.totalorder %s206, %s209
      %p218 = scmp.eq.s32.totalorder %s30, 1
      %p219 = por %p217, %p218
      %p220 = scmp.ne.s32.totalorder %s209, %s210
      %p221 = scmp.eq.s32.totalorder %s30, 0
      %p222 = por %p220, %p221
      %p223 = scmp.ne.s32.totalorder %s209, %s210
      %p224 = scmp.eq.s32.totalorder %s31, 1
      %p225 = por %p223, %p224
      %p227 = scmp.ne.s32.totalorder %s210, %s226
      %p228 = scmp.eq.s32.totalorder %s31, 0
      %p229 = por %p227, %p228
      %p230 = scmp.le.s32.totalorder 1, %s25
      %p231 = scmp.lt.s32.totalorder %s25, 3
      %p232 = pnand %p230, %p231
      %p233 = pneg %p232
      // Predicated region
      $region9: #{tpu_custom_call.1} parent=5 // pred_check
        _
      $region10: #{tpu_custom_call.1} parent=5 // pred_check_branch
        %235 = sbr.rel (%p232) target = $region12
      $region11: #{tpu_custom_call.1} parent=5 // pred_region
        %s236 = ssub.s32 %s25, 1
        // Predicated region
        $region13: #{tpu_custom_call.1} parent=11 // pred_check
          %p237 = pneg %p84
        $region14: #{tpu_custom_call.1} parent=11 // pred_check_branch
          %239 = sbr.rel (%p237) target = $region16
        $region15: #{tpu_custom_call.1} parent=11 // pred_region
          %241 = vsyncadd [#allocation8], 0
          %s242 = sshll.u32 %s1, 4
          %s243 = int_to_ptr.hbm [resolvable:$true] %s242
          %s244 = sshll.u32 [#allocation7], 4
          %s245 = int_to_ptr.vmem [resolvable:$true] %s244
          %250 = dma.hbm_to_vmem [thread:$0]  %s243, 256, %s245, [#allocation8], 64, 64, 4
        $region16: #{tpu_custom_call.1} parent=11 // pred_fallthru
          _
        // Predicated region
        $region17: #{tpu_custom_call.1} parent=11 // pred_check
          %p251 = pneg %p105
        $region18: #{tpu_custom_call.1} parent=11 // pred_check_branch
          %253 = sbr.rel (%p251) target = $region20
        $region19: #{tpu_custom_call.1} parent=11 // pred_region
          %255 = vsyncadd [#allocation8], 0
          %s256 = sshll.u32 %s2, 4
          %s257 = int_to_ptr.hbm [resolvable:$true] %s256
          %s258 = sshll.u32 [#allocation9], 4
          %s259 = int_to_ptr.vmem [resolvable:$true] %s258
          %264 = dma.hbm_to_vmem [thread:$0]  %s257, 256, %s259, [#allocation8], 64, 64, 4
        $region20: #{tpu_custom_call.1} parent=11 // pred_fallthru
          _
        // Predicated region
        $region21: #{tpu_custom_call.1} parent=11 // pred_check
          %p265 = pneg %p126
        $region22: #{tpu_custom_call.1} parent=11 // pred_check_branch
          %267 = sbr.rel (%p265) target = $region24
        $region23: #{tpu_custom_call.1} parent=11 // pred_region
          %269 = vsyncadd [#allocation11], 0
          %s270 = sshll.u32 %s3, 4
          %s271 = int_to_ptr.hbm [resolvable:$true] %s270
          %s272 = sshll.u32 [#allocation10], 4
          %s273 = int_to_ptr.vmem [resolvable:$true] %s272
          %278 = dma.hbm_to_vmem [thread:$0]  %s271, 256, %s273, [#allocation11], 64, 64, 4
        $region24: #{tpu_custom_call.1} parent=11 // pred_fallthru
          _
        // Predicated region
        $region25: #{tpu_custom_call.1} parent=11 // pred_check
          %p279 = pneg %p147
        $region26: #{tpu_custom_call.1} parent=11 // pred_check_branch
          %281 = sbr.rel (%p279) target = $region28
        $region27: #{tpu_custom_call.1} parent=11 // pred_region
          %283 = vsyncadd [#allocation11], 0
          %s284 = sshll.u32 %s4, 4
          %s285 = int_to_ptr.hbm [resolvable:$true] %s284
          %s286 = sshll.u32 [#allocation12], 4
          %s287 = int_to_ptr.vmem [resolvable:$true] %s286
          %292 = dma.hbm_to_vmem [thread:$0]  %s285, 256, %s287, [#allocation11], 64, 64, 4
        $region28: #{tpu_custom_call.1} parent=11 // pred_fallthru
          _
        // Predicated region
        $region29: #{tpu_custom_call.1} parent=11 // pred_check
          %p293 = pneg %p168
        $region30: #{tpu_custom_call.1} parent=11 // pred_check_branch
          %295 = sbr.rel (%p293) target = $region32
        $region31: #{tpu_custom_call.1} parent=11 // pred_region
          _
        $region32: #{tpu_custom_call.1} parent=11 // pred_fallthru
          _
      $region12: #{tpu_custom_call.1} parent=5 // pred_fallthru
        _
      %p296 = scmp.lt.s32.totalorder %s25, 2
      // Predicated region
      $region33: #{tpu_custom_call.1} parent=5 // pred_check
        %p297 = pneg %p296
      $region34: #{tpu_custom_call.1} parent=5 // pred_check_branch
        %299 = sbr.rel (%p297) target = $region36
      $region35: #{tpu_custom_call.1} parent=5 // pred_region
        // Predicated region
        $region37: #{tpu_custom_call.1} parent=35 // pred_check
          %p300 = pneg %p57
        $region38: #{tpu_custom_call.1} parent=35 // pred_check_branch
          %302 = sbr.rel (%p300) target = $region40
        $region39: #{tpu_custom_call.1} parent=35 // pred_region
          %s303 = sand.u32 %s47, 1
          %s304 = scalar_lea.sflag [#allocation5], %s303
          %s305 = sand.u32 %s47, 1
          %s306 = smul.addr %s305, 4
          %s307 = scalar_lea.vmem [#allocation4], %s306
          %309 = vsyncadd %s304, 0
          %s310 = smul.addr %s32, 4
          %s311 = scalar_lea.hbm %s0, %s310
          %s313 = sshll.u32 %s311, 4
          %s314 = int_to_ptr.hbm [resolvable:$true] %s313
          %s315 = sshll.u32 %s307, 4
          %s316 = int_to_ptr.vmem [resolvable:$true] %s315
          %318 = dma.hbm_to_vmem [thread:$0]  %s314, 64, %s316, %s304
        $region40: #{tpu_custom_call.1} parent=35 // pred_fallthru
          _
      $region36: #{tpu_custom_call.1} parent=5 // pred_fallthru
        _
      %p319 = scmp.le.s32.totalorder 1, %s25
      %p320 = scmp.lt.s32.totalorder %s25, 3
      %p321 = pnand %p319, %p320
      %p322 = pneg %p321
      // Predicated region
      $region41: #{tpu_custom_call.1} parent=5 // pred_check
        _
      $region42: #{tpu_custom_call.1} parent=5 // pred_check_branch
        %324 = sbr.rel (%p321) target = $region44
      $region43: #{tpu_custom_call.1} parent=5 // pred_region
        %s325 = ssub.s32 %s25, 1
        %s326 = sand.u32 %s50, 1
        %s327 = scalar_lea.sflag [#allocation5], %s326
        %s328 = sand.u32 %s50, 1
        %s329 = smul.addr %s328, 4
        %s330 = scalar_lea.vmem [#allocation4], %s329
        // Predicated region
        $region45: #{tpu_custom_call.1} parent=43 // pred_check
          %p331 = pneg %p63
        $region46: #{tpu_custom_call.1} parent=43 // pred_check_branch
          %333 = sbr.rel (%p331) target = $region48
        $region47: #{tpu_custom_call.1} parent=43 // pred_region
          %335 = dma.done %s327, 64
        $region48: #{tpu_custom_call.1} parent=43 // pred_fallthru
          _
        // Predicated region
        $region49: #{tpu_custom_call.1} parent=43 // pred_check
          %p336 = pneg %p84
        $region50: #{tpu_custom_call.1} parent=43 // pred_check_branch
          %338 = sbr.rel (%p336) target = $region52
        $region51: #{tpu_custom_call.1} parent=43 // pred_region
          %340 = dma.done [#allocation8], 256
        $region52: #{tpu_custom_call.1} parent=43 // pred_fallthru
          _
        // Predicated region
        $region53: #{tpu_custom_call.1} parent=43 // pred_check
          %p341 = pneg %p105
        $region54: #{tpu_custom_call.1} parent=43 // pred_check_branch
          %343 = sbr.rel (%p341) target = $region56
        $region55: #{tpu_custom_call.1} parent=43 // pred_region
          %345 = dma.done [#allocation8], 256
        $region56: #{tpu_custom_call.1} parent=43 // pred_fallthru
          _
        // Predicated region
        $region57: #{tpu_custom_call.1} parent=43 // pred_check
          %p346 = pneg %p126
        $region58: #{tpu_custom_call.1} parent=43 // pred_check_branch
          %348 = sbr.rel (%p346) target = $region60
        $region59: #{tpu_custom_call.1} parent=43 // pred_region
          %350 = dma.done [#allocation11], 256
        $region60: #{tpu_custom_call.1} parent=43 // pred_fallthru
          _
        // Predicated region
        $region61: #{tpu_custom_call.1} parent=43 // pred_check
          %p351 = pneg %p147
        $region62: #{tpu_custom_call.1} parent=43 // pred_check_branch
          %353 = sbr.rel (%p351) target = $region64
        $region63: #{tpu_custom_call.1} parent=43 // pred_region
          %355 = dma.done [#allocation11], 256
        $region64: #{tpu_custom_call.1} parent=43 // pred_fallthru
          _
        %s356 = sand.u32 %s50, 1
        %s357 = scalar_lea.sflag [#allocation5], %s356
        %s358 = sand.u32 %s50, 1
        %s359 = smul.addr %s358, 4
        %s360 = scalar_lea.vmem [#allocation4], %s359
        %p361 = pneg %p63
        %p362 = pneg %p60
        %p363 = pneg %p84
        %p364 = pneg %p81
        %p365 = pneg %p105
        %p366 = pneg %p102
        %p367 = pneg %p126
        %p368 = pneg %p123
        %p369 = pneg %p147
        %p370 = pneg %p144
        %p371 = pneg %p168
        %p372 = pneg %p165
        %p373 = pneg %p194
        %p374 = pneg %p191
        %s375 = sand.u32 %s181, 1
        %s376 = scalar_lea.sflag [#allocation6], %s375
        %s377 = sand.u32 %s181, 1
        %s378 = smul.addr %s377, 8
        %s379 = scalar_lea.vmem [#allocation13], %s378
        %p380 = pneg %p222
        %p381 = pneg %p219
        %s382 = sand.u32 %s209, 1
        %s383 = scalar_lea.sflag [#allocation15], %s382
        %s384 = sand.u32 %s209, 1
        %s385 = smul.addr %s384, 64
        %s386 = scalar_lea.vmem [#allocation14], %s385
        %s387 = smul.u32 8, %s35
        %v389 = vld [vmem:[%s330] sm:$0xf]
        %s390 = smul.u32 %s35, 4
        %s391 = smul.addr %s390, 4
        %s392 = scalar_lea.vmem [#allocation7], %s391
        %v393 = vld [vmem:[%s392] sm:$0xf]
        %v394 = vld [vmem:[%s392 + $0x4] sm:$0xf]
        %v395 = vld [vmem:[%s392 + $0x8] sm:$0xf]
        %v396 = vld [vmem:[%s392 + $0xc] sm:$0xf]
        %v401 = vunpack.c.l.b16 %v393
        %v402 = vunpack.c.l.b16 %v394
        %v403 = vunpack.c.l.b16 %v395
        %v404 = vunpack.c.l.b16 %v396
        %v405 = vpack.c.b16 %v402, %v401
        %v406 = vpack.c.b16 %v404, %v403
        %vm409 = vcmask 261120
        %v411 = vsel %vm409, %v389, 0
        %413 = vmatpush.bf16.msra.mxu0 0
        %414 = vmatpush.bf16.msra.mxu0 0
        %415 = vmatpush.bf16.msra.mxu0 0
        %416 = vmatpush.bf16.msra.mxu0 0
        %417 = vmatpush.bf16.msra.mxu0 0
        %418 = vmatpush.bf16.msra.mxu0 0
        %419 = vmatpush.bf16.msra.mxu0 %v406
        %420 = vmatpush.bf16.msra.mxu0 %v405
        %421 = vmatmul.bf16.gmra.mxu0 %v411
        %v422 = vpop.f32.mrf.mxu0
        %v423 = vadd.f32 0.0, %v422
        %v424 = vpop.f32.mrf.mxu0
        %425 = vdwg.mxu0
        %s426 = smul.addr %s390, 4
        %s427 = scalar_lea.vmem [#allocation9], %s426
        %v428 = vld [vmem:[%s427] sm:$0xf]
        %v429 = vld [vmem:[%s427 + $0x4] sm:$0xf]
        %v430 = vld [vmem:[%s427 + $0x8] sm:$0xf]
        %v431 = vld [vmem:[%s427 + $0xc] sm:$0xf]
        %v436 = vunpack.c.l.b16 %v428
        %v437 = vunpack.c.l.b16 %v429
        %v438 = vunpack.c.l.b16 %v430
        %v439 = vunpack.c.l.b16 %v431
        %v440 = vpack.c.b16 %v437, %v436
        %v441 = vpack.c.b16 %v439, %v438
        %444 = vmatpush.bf16.msra.mxu0 0
        %445 = vmatpush.bf16.msra.mxu0 0
        %446 = vmatpush.bf16.msra.mxu0 0
        %447 = vmatpush.bf16.msra.mxu0 0
        %448 = vmatpush.bf16.msra.mxu0 0
        %449 = vmatpush.bf16.msra.mxu0 0
        %450 = vmatpush.bf16.msra.mxu0 %v441
        %451 = vmatpush.bf16.msra.mxu0 %v440
        %452 = vmatmul.bf16.gmra.mxu0 %v411
        %v453 = vpop.f32.mrf.mxu0
        %v454 = vadd.f32 0.0, %v453
        %v455 = vpop.f32.mrf.mxu0
        %456 = vdwg.mxu0
        %s457 = smul.addr %s390, 4
        %s458 = scalar_lea.vmem [#allocation10], %s457
        %v459 = vld [vmem:[%s458] sm:$0xf]
        %v460 = vld [vmem:[%s458 + $0x4] sm:$0xf]
        %v461 = vld [vmem:[%s458 + $0x8] sm:$0xf]
        %v462 = vld [vmem:[%s458 + $0xc] sm:$0xf]
        %v467 = vunpack.c.l.b16 %v459
        %v468 = vunpack.c.l.b16 %v460
        %v469 = vunpack.c.l.b16 %v461
        %v470 = vunpack.c.l.b16 %v462
        %v471 = vpack.c.b16 %v468, %v467
        %v472 = vpack.c.b16 %v470, %v469
        %475 = vmatpush.bf16.msra.mxu0 0
        %476 = vmatpush.bf16.msra.mxu0 0
        %477 = vmatpush.bf16.msra.mxu0 0
        %478 = vmatpush.bf16.msra.mxu0 0
        %479 = vmatpush.bf16.msra.mxu0 0
        %480 = vmatpush.bf16.msra.mxu0 0
        %481 = vmatpush.bf16.msra.mxu0 %v472
        %482 = vmatpush.bf16.msra.mxu0 %v471
        %483 = vmatmul.bf16.gmra.mxu0 %v411
        %v484 = vpop.f32.mrf.mxu0
        %v485 = vadd.f32 0.0, %v484
        %v486 = vpop.f32.mrf.mxu0
        %487 = vdwg.mxu0
        %v488 = vpack.c.bf16 %v423, %v423
        %v489 = vpack.c.bf16 %v454, %v454
        %v490 = vpack.c.bf16 %v485, %v485
        %vm491 = vcmask 31744
        %v493 = vsel %vm491, %v488, 0
        %v496 = vsel %vm491, %v489, 0
        %498 = vmatpush.bf16.xpose.msra.mxu0 0
        %499 = vmatpush.bf16.xpose.msra.mxu0 0
        %500 = vmatpush.bf16.xpose.msra.mxu0 0
        %501 = vmatpush.bf16.xpose.msra.mxu0 0
        %502 = vmatpush.bf16.xpose.msra.mxu0 0
        %503 = vmatpush.bf16.xpose.msra.mxu0 0
        %504 = vmatpush.bf16.xpose.msra.mxu0 0
        %505 = vmatpush.bf16.xpose.msra.mxu0 %v496
        %506 = vmatmul.bf16.gmra.mxu0 %v493
        %v507 = vpop.f32.mrf.mxu0
        %v508 = vadd.f32 0.0, %v507
        %v509 = vpop.f32.mrf.mxu0
        %510 = vdwg.mxu0
        %vm511 = vcmask 64512
        %v512 = vsel %vm511, %v508, -inf
        %513 = vmax.xlane.f32.xlu0 %v512
        %v514 = vpop.xlane.xlu0 %513
        %v515 = vsub.f32 %v508, %v514
        %v516 = vmul.f32 %v515, 1.442695
        %v517 = vpow.pop %v516
        %v518 = vsel %vm511, %v517, 0.0
        %519 = vadd.xlane.f32.xlu0 %v518
        %v520 = vpop.xlane.xlu0 %519
        %v521 = vrcp.pop %v520
        %v522 = vmul.f32 %v517, %v521
        %523 = vst.msk [vmem:[%s386] sm:$0xff] %vm511, %v522
        %v524 = vpack.c.bf16 %v522, %v522
        %v526 = vsel %vm511, %v524, 0
        %vm528 = vcmask 1043456
        %v530 = vsel %vm528, %v490, 0
        %532 = vmatpush.bf16.msra.mxu0 0
        %533 = vmatpush.bf16.msra.mxu0 0
        %534 = vmatpush.bf16.msra.mxu0 0
        %535 = vmatpush.bf16.msra.mxu0 0
        %536 = vmatpush.bf16.msra.mxu0 0
        %537 = vmatpush.bf16.msra.mxu0 0
        %538 = vmatpush.bf16.msra.mxu0 0
        %539 = vmatpush.bf16.msra.mxu0 %v530
        %540 = vmatmul.bf16.gmra.mxu0 %v526
        %v541 = vpop.f32.mrf.mxu0
        %v542 = vadd.f32 0.0, %v541
        %v543 = vpop.f32.mrf.mxu0
        %544 = vdwg.mxu0
        %v545 = vpack.c.bf16 %v542, %v542
        %vm546 = vcmask 27648
        %547 = vst.msk [vmem:[#allocation3] sm:$0xf] %vm546, %v545
        %v549 = vunpack.c.l.b16 %v488
        %v550 = vpack.c.b16 %v549, %v549
        %551 = vrot.lane.b32.xlu0 %v550, 124
        %v552 = vpop.permute.xlu0 %551
        %v554 = vunpack.c.l.b16 %v489
        %v555 = vpack.c.b16 %v554, %v554
        %556 = vrot.lane.b32.xlu0 %v555, 124
        %v557 = vpop.permute.xlu0 %556
        %v559 = vsel %vm491, %v552, 0
        %v562 = vsel %vm491, %v557, 0
        %564 = vmatpush.bf16.xpose.msra.mxu0 0
        %565 = vmatpush.bf16.xpose.msra.mxu0 0
        %566 = vmatpush.bf16.xpose.msra.mxu0 0
        %567 = vmatpush.bf16.xpose.msra.mxu0 0
        %568 = vmatpush.bf16.xpose.msra.mxu0 0
        %569 = vmatpush.bf16.xpose.msra.mxu0 0
        %570 = vmatpush.bf16.xpose.msra.mxu0 0
        %571 = vmatpush.bf16.xpose.msra.mxu0 %v562
        %572 = vmatmul.bf16.gmra.mxu0 %v559
        %v573 = vpop.f32.mrf.mxu0
        %v574 = vadd.f32 0.0, %v573
        %v575 = vpop.f32.mrf.mxu0
        %576 = vdwg.mxu0
        %v577 = vsel %vm511, %v574, -inf
        %578 = vmax.xlane.f32.xlu0 %v577
        %v579 = vpop.xlane.xlu0 %578
        %v580 = vsub.f32 %v574, %v579
        %v581 = vmul.f32 %v580, 1.442695
        %v582 = vpow.pop %v581
        %v583 = vsel %vm511, %v582, 0.0
        %584 = vadd.xlane.f32.xlu0 %v583
        %v585 = vpop.xlane.xlu0 %584
        %v586 = vrcp.pop %v585
        %v587 = vmul.f32 %v582, %v586
        %s588 = scalar_lea.vmem %s386, 8 [#allocation14]
        %589 = vst.msk [vmem:[%s588] sm:$0xff] %vm511, %v587
        %v590 = vpack.c.bf16 %v587, %v587
        %v592 = vunpack.c.l.b16 %v490
        %v593 = vpack.c.b16 %v592, %v592
        %594 = vrot.lane.b32.xlu0 %v593, 124
        %v595 = vpop.permute.xlu0 %594
        %v597 = vsel %vm511, %v590, 0
        %v600 = vsel %vm528, %v595, 0
        %602 = vmatpush.bf16.msra.mxu0 0
        %603 = vmatpush.bf16.msra.mxu0 0
        %604 = vmatpush.bf16.msra.mxu0 0
        %605 = vmatpush.bf16.msra.mxu0 0
        %606 = vmatpush.bf16.msra.mxu0 0
        %607 = vmatpush.bf16.msra.mxu0 0
        %608 = vmatpush.bf16.msra.mxu0 0
        %609 = vmatpush.bf16.msra.mxu0 %v600
        %610 = vmatmul.bf16.gmra.mxu0 %v597
        %v611 = vpop.f32.mrf.mxu0
        %v612 = vadd.f32 0.0, %v611
        %v613 = vpop.f32.mrf.mxu0
        %614 = vdwg.mxu0
        %v615 = vpack.c.bf16 %v612, %v612
        %617 = vrot.lane.b32.xlu0 %v615, 4
        %v618 = vpop.permute.xlu0 %617
        %vm620 = vcmask 60448
        %621 = vst.msk [vmem:[#allocation3] sm:$0xf] %vm620, %v618
        %622 = vrot.lane.b32.xlu0 %v550, 120
        %v623 = vpop.permute.xlu0 %622
        %624 = vrot.lane.b32.xlu0 %v555, 120
        %v625 = vpop.permute.xlu0 %624
        %v627 = vsel %vm491, %v623, 0
        %v630 = vsel %vm491, %v625, 0
        %632 = vmatpush.bf16.xpose.msra.mxu0 0
        %633 = vmatpush.bf16.xpose.msra.mxu0 0
        %634 = vmatpush.bf16.xpose.msra.mxu0 0
        %635 = vmatpush.bf16.xpose.msra.mxu0 0
        %636 = vmatpush.bf16.xpose.msra.mxu0 0
        %637 = vmatpush.bf16.xpose.msra.mxu0 0
        %638 = vmatpush.bf16.xpose.msra.mxu0 0
        %639 = vmatpush.bf16.xpose.msra.mxu0 %v630
        %640 = vmatmul.bf16.gmra.mxu0 %v627
        %v641 = vpop.f32.mrf.mxu0
        %v642 = vadd.f32 0.0, %v641
        %v643 = vpop.f32.mrf.mxu0
        %644 = vdwg.mxu0
        %v645 = vsel %vm511, %v642, -inf
        %646 = vmax.xlane.f32.xlu0 %v645
        %v647 = vpop.xlane.xlu0 %646
        %v648 = vsub.f32 %v642, %v647
        %v649 = vmul.f32 %v648, 1.442695
        %v650 = vpow.pop %v649
        %v651 = vsel %vm511, %v650, 0.0
        %652 = vadd.xlane.f32.xlu0 %v651
        %v653 = vpop.xlane.xlu0 %652
        %v654 = vrcp.pop %v653
        %v655 = vmul.f32 %v650, %v654
        %s656 = scalar_lea.vmem %s386, 16 [#allocation14]
        %657 = vst.msk [vmem:[%s656] sm:$0xff] %vm511, %v655
        %v658 = vpack.c.bf16 %v655, %v655
        %659 = vrot.lane.b32.xlu0 %v593, 120
        %v660 = vpop.permute.xlu0 %659
        %v662 = vsel %vm511, %v658, 0
        %v665 = vsel %vm528, %v660, 0
        %667 = vmatpush.bf16.msra.mxu0 0
        %668 = vmatpush.bf16.msra.mxu0 0
        %669 = vmatpush.bf16.msra.mxu0 0
        %670 = vmatpush.bf16.msra.mxu0 0
        %671 = vmatpush.bf16.msra.mxu0 0
        %672 = vmatpush.bf16.msra.mxu0 0
        %673 = vmatpush.bf16.msra.mxu0 0
        %674 = vmatpush.bf16.msra.mxu0 %v665
        %675 = vmatmul.bf16.gmra.mxu0 %v662
        %v676 = vpop.f32.mrf.mxu0
        %v677 = vadd.f32 0.0, %v676
        %v678 = vpop.f32.mrf.mxu0
        %679 = vdwg.mxu0
        %v680 = vpack.c.bf16 %v677, %v677
        %682 = vrot.lane.b32.xlu0 %v680, 8
        %v683 = vpop.permute.xlu0 %682
        %vm685 = vcmask 93248
        %686 = vst.msk [vmem:[#allocation3] sm:$0xf] %vm685, %v683
        %687 = vrot.lane.b32.xlu0 %v550, 116
        %v688 = vpop.permute.xlu0 %687
        %689 = vrot.lane.b32.xlu0 %v555, 116
        %v690 = vpop.permute.xlu0 %689
        %v692 = vsel %vm491, %v688, 0
        %v695 = vsel %vm491, %v690, 0
        %697 = vmatpush.bf16.xpose.msra.mxu0 0
        %698 = vmatpush.bf16.xpose.msra.mxu0 0
        %699 = vmatpush.bf16.xpose.msra.mxu0 0
        %700 = vmatpush.bf16.xpose.msra.mxu0 0
        %701 = vmatpush.bf16.xpose.msra.mxu0 0
        %702 = vmatpush.bf16.xpose.msra.mxu0 0
        %703 = vmatpush.bf16.xpose.msra.mxu0 0
        %704 = vmatpush.bf16.xpose.msra.mxu0 %v695
        %705 = vmatmul.bf16.gmra.mxu0 %v692
        %v706 = vpop.f32.mrf.mxu0
        %v707 = vadd.f32 0.0, %v706
        %v708 = vpop.f32.mrf.mxu0
        %709 = vdwg.mxu0
        %v710 = vsel %vm511, %v707, -inf
        %711 = vmax.xlane.f32.xlu0 %v710
        %v712 = vpop.xlane.xlu0 %711
        %v713 = vsub.f32 %v707, %v712
        %v714 = vmul.f32 %v713, 1.442695
        %v715 = vpow.pop %v714
        %v716 = vsel %vm511, %v715, 0.0
        %717 = vadd.xlane.f32.xlu0 %v716
        %v718 = vpop.xlane.xlu0 %717
        %v719 = vrcp.pop %v718
        %v720 = vmul.f32 %v715, %v719
        %s721 = scalar_lea.vmem %s386, 24 [#allocation14]
        %722 = vst.msk [vmem:[%s721] sm:$0xff] %vm511, %v720
        %v723 = vpack.c.bf16 %v720, %v720
        %724 = vrot.lane.b32.xlu0 %v593, 116
        %v725 = vpop.permute.xlu0 %724
        %v727 = vsel %vm511, %v723, 0
        %v730 = vsel %vm528, %v725, 0
        %732 = vmatpush.bf16.msra.mxu0 0
        %733 = vmatpush.bf16.msra.mxu0 0
        %734 = vmatpush.bf16.msra.mxu0 0
        %735 = vmatpush.bf16.msra.mxu0 0
        %736 = vmatpush.bf16.msra.mxu0 0
        %737 = vmatpush.bf16.msra.mxu0 0
        %738 = vmatpush.bf16.msra.mxu0 0
        %739 = vmatpush.bf16.msra.mxu0 %v730
        %740 = vmatmul.bf16.gmra.mxu0 %v727
        %v741 = vpop.f32.mrf.mxu0
        %v742 = vadd.f32 0.0, %v741
        %v743 = vpop.f32.mrf.mxu0
        %744 = vdwg.mxu0
        %v745 = vpack.c.bf16 %v742, %v742
        %747 = vrot.lane.b32.xlu0 %v745, 12
        %v748 = vpop.permute.xlu0 %747
        %vm750 = vcmask 126048
        %751 = vst.msk [vmem:[#allocation3] sm:$0xf] %vm750, %v748
        %752 = vrot.lane.b32.xlu0 %v550, 112
        %v753 = vpop.permute.xlu0 %752
        %754 = vrot.lane.b32.xlu0 %v555, 112
        %v755 = vpop.permute.xlu0 %754
        %v757 = vsel %vm491, %v753, 0
        %v760 = vsel %vm491, %v755, 0
        %762 = vmatpush.bf16.xpose.msra.mxu0 0
        %763 = vmatpush.bf16.xpose.msra.mxu0 0
        %764 = vmatpush.bf16.xpose.msra.mxu0 0
        %765 = vmatpush.bf16.xpose.msra.mxu0 0
        %766 = vmatpush.bf16.xpose.msra.mxu0 0
        %767 = vmatpush.bf16.xpose.msra.mxu0 0
        %768 = vmatpush.bf16.xpose.msra.mxu0 0
        %769 = vmatpush.bf16.xpose.msra.mxu0 %v760
        %770 = vmatmul.bf16.gmra.mxu0 %v757
        %v771 = vpop.f32.mrf.mxu0
        %v772 = vadd.f32 0.0, %v771
        %v773 = vpop.f32.mrf.mxu0
        %774 = vdwg.mxu0
        %v775 = vsel %vm511, %v772, -inf
        %776 = vmax.xlane.f32.xlu0 %v775
        %v777 = vpop.xlane.xlu0 %776
        %v778 = vsub.f32 %v772, %v777
        %v779 = vmul.f32 %v778, 1.442695
        %v780 = vpow.pop %v779
        %v781 = vsel %vm511, %v780, 0.0
        %782 = vadd.xlane.f32.xlu0 %v781
        %v783 = vpop.xlane.xlu0 %782
        %v784 = vrcp.pop %v783
        %v785 = vmul.f32 %v780, %v784
        %s786 = scalar_lea.vmem %s386, 32 [#allocation14]
        %787 = vst.msk [vmem:[%s786] sm:$0xff] %vm511, %v785
        %v788 = vpack.c.bf16 %v785, %v785
        %789 = vrot.lane.b32.xlu0 %v593, 112
        %v790 = vpop.permute.xlu0 %789
        %v792 = vsel %vm511, %v788, 0
        %v795 = vsel %vm528, %v790, 0
        %797 = vmatpush.bf16.msra.mxu0 0
        %798 = vmatpush.bf16.msra.mxu0 0
        %799 = vmatpush.bf16.msra.mxu0 0
        %800 = vmatpush.bf16.msra.mxu0 0
        %801 = vmatpush.bf16.msra.mxu0 0
        %802 = vmatpush.bf16.msra.mxu0 0
        %803 = vmatpush.bf16.msra.mxu0 0
        %804 = vmatpush.bf16.msra.mxu0 %v795
        %805 = vmatmul.bf16.gmra.mxu0 %v792
        %v806 = vpop.f32.mrf.mxu0
        %v807 = vadd.f32 0.0, %v806
        %v808 = vpop.f32.mrf.mxu0
        %809 = vdwg.mxu0
        %v810 = vpack.c.bf16 %v807, %v807
        %812 = vrot.lane.b32.xlu0 %v810, 16
        %v813 = vpop.permute.xlu0 %812
        %vm815 = vcmask 158848
        %816 = vst.msk [vmem:[#allocation3] sm:$0xf] %vm815, %v813
        %817 = vrot.lane.b32.xlu0 %v550, 108
        %v818 = vpop.permute.xlu0 %817
        %819 = vrot.lane.b32.xlu0 %v555, 108
        %v820 = vpop.permute.xlu0 %819
        %v822 = vsel %vm491, %v818, 0
        %v825 = vsel %vm491, %v820, 0
        %827 = vmatpush.bf16.xpose.msra.mxu0 0
        %828 = vmatpush.bf16.xpose.msra.mxu0 0
        %829 = vmatpush.bf16.xpose.msra.mxu0 0
        %830 = vmatpush.bf16.xpose.msra.mxu0 0
        %831 = vmatpush.bf16.xpose.msra.mxu0 0
        %832 = vmatpush.bf16.xpose.msra.mxu0 0
        %833 = vmatpush.bf16.xpose.msra.mxu0 0
        %834 = vmatpush.bf16.xpose.msra.mxu0 %v825
        %835 = vmatmul.bf16.gmra.mxu0 %v822
        %v836 = vpop.f32.mrf.mxu0
        %v837 = vadd.f32 0.0, %v836
        %v838 = vpop.f32.mrf.mxu0
        %839 = vdwg.mxu0
        %v840 = vsel %vm511, %v837, -inf
        %841 = vmax.xlane.f32.xlu0 %v840
        %v842 = vpop.xlane.xlu0 %841
        %v843 = vsub.f32 %v837, %v842
        %v844 = vmul.f32 %v843, 1.442695
        %v845 = vpow.pop %v844
        %v846 = vsel %vm511, %v845, 0.0
        %847 = vadd.xlane.f32.xlu0 %v846
        %v848 = vpop.xlane.xlu0 %847
        %v849 = vrcp.pop %v848
        %v850 = vmul.f32 %v845, %v849
        %s851 = scalar_lea.vmem %s386, 40 [#allocation14]
        %852 = vst.msk [vmem:[%s851] sm:$0xff] %vm511, %v850
        %v853 = vpack.c.bf16 %v850, %v850
        %854 = vrot.lane.b32.xlu0 %v593, 108
        %v855 = vpop.permute.xlu0 %854
        %v857 = vsel %vm511, %v853, 0
        %v860 = vsel %vm528, %v855, 0
        %862 = vmatpush.bf16.msra.mxu0 0
        %863 = vmatpush.bf16.msra.mxu0 0
        %864 = vmatpush.bf16.msra.mxu0 0
        %865 = vmatpush.bf16.msra.mxu0 0
        %866 = vmatpush.bf16.msra.mxu0 0
        %867 = vmatpush.bf16.msra.mxu0 0
        %868 = vmatpush.bf16.msra.mxu0 0
        %869 = vmatpush.bf16.msra.mxu0 %v860
        %870 = vmatmul.bf16.gmra.mxu0 %v857
        %v871 = vpop.f32.mrf.mxu0
        %v872 = vadd.f32 0.0, %v871
        %v873 = vpop.f32.mrf.mxu0
        %874 = vdwg.mxu0
        %v875 = vpack.c.bf16 %v872, %v872
        %877 = vrot.lane.b32.xlu0 %v875, 20
        %v878 = vpop.permute.xlu0 %877
        %vm880 = vcmask 191648
        %881 = vst.msk [vmem:[#allocation3] sm:$0xf] %vm880, %v878
        %882 = vrot.lane.b32.xlu0 %v550, 104
        %v883 = vpop.permute.xlu0 %882
        %884 = vrot.lane.b32.xlu0 %v555, 104
        %v885 = vpop.permute.xlu0 %884
        %v887 = vsel %vm491, %v883, 0
        %v890 = vsel %vm491, %v885, 0
        %892 = vmatpush.bf16.xpose.msra.mxu0 0
        %893 = vmatpush.bf16.xpose.msra.mxu0 0
        %894 = vmatpush.bf16.xpose.msra.mxu0 0
        %895 = vmatpush.bf16.xpose.msra.mxu0 0
        %896 = vmatpush.bf16.xpose.msra.mxu0 0
        %897 = vmatpush.bf16.xpose.msra.mxu0 0
        %898 = vmatpush.bf16.xpose.msra.mxu0 0
        %899 = vmatpush.bf16.xpose.msra.mxu0 %v890
        %900 = vmatmul.bf16.gmra.mxu0 %v887
        %v901 = vpop.f32.mrf.mxu0
        %v902 = vadd.f32 0.0, %v901
        %v903 = vpop.f32.mrf.mxu0
        %904 = vdwg.mxu0
        %v905 = vsel %vm511, %v902, -inf
        %906 = vmax.xlane.f32.xlu0 %v905
        %v907 = vpop.xlane.xlu0 %906
        %v908 = vsub.f32 %v902, %v907
        %v909 = vmul.f32 %v908, 1.442695
        %v910 = vpow.pop %v909
        %v911 = vsel %vm511, %v910, 0.0
        %912 = vadd.xlane.f32.xlu0 %v911
        %v913 = vpop.xlane.xlu0 %912
        %v914 = vrcp.pop %v913
        %v915 = vmul.f32 %v910, %v914
        %s916 = scalar_lea.vmem %s386, 48 [#allocation14]
        %917 = vst.msk [vmem:[%s916] sm:$0xff] %vm511, %v915
        %v918 = vpack.c.bf16 %v915, %v915
        %919 = vrot.lane.b32.xlu0 %v593, 104
        %v920 = vpop.permute.xlu0 %919
        %v922 = vsel %vm511, %v918, 0
        %v925 = vsel %vm528, %v920, 0
        %927 = vmatpush.bf16.msra.mxu0 0
        %928 = vmatpush.bf16.msra.mxu0 0
        %929 = vmatpush.bf16.msra.mxu0 0
        %930 = vmatpush.bf16.msra.mxu0 0
        %931 = vmatpush.bf16.msra.mxu0 0
        %932 = vmatpush.bf16.msra.mxu0 0
        %933 = vmatpush.bf16.msra.mxu0 0
        %934 = vmatpush.bf16.msra.mxu0 %v925
        %935 = vmatmul.bf16.gmra.mxu0 %v922
        %v936 = vpop.f32.mrf.mxu0
        %v937 = vadd.f32 0.0, %v936
        %v938 = vpop.f32.mrf.mxu0
        %939 = vdwg.mxu0
        %v940 = vpack.c.bf16 %v937, %v937
        %942 = vrot.lane.b32.xlu0 %v940, 24
        %v943 = vpop.permute.xlu0 %942
        %vm945 = vcmask 224448
        %946 = vst.msk [vmem:[#allocation3] sm:$0xf] %vm945, %v943
        %947 = vrot.lane.b32.xlu0 %v550, 100
        %v948 = vpop.permute.xlu0 %947
        %949 = vrot.lane.b32.xlu0 %v555, 100
        %v950 = vpop.permute.xlu0 %949
        %v952 = vsel %vm491, %v948, 0
        %v955 = vsel %vm491, %v950, 0
        %957 = vmatpush.bf16.xpose.msra.mxu0 0
        %958 = vmatpush.bf16.xpose.msra.mxu0 0
        %959 = vmatpush.bf16.xpose.msra.mxu0 0
        %960 = vmatpush.bf16.xpose.msra.mxu0 0
        %961 = vmatpush.bf16.xpose.msra.mxu0 0
        %962 = vmatpush.bf16.xpose.msra.mxu0 0
        %963 = vmatpush.bf16.xpose.msra.mxu0 0
        %964 = vmatpush.bf16.xpose.msra.mxu0 %v955
        %965 = vmatmul.bf16.gmra.mxu0 %v952
        %v966 = vpop.f32.mrf.mxu0
        %v967 = vadd.f32 0.0, %v966
        %v968 = vpop.f32.mrf.mxu0
        %969 = vdwg.mxu0
        %v970 = vsel %vm511, %v967, -inf
        %971 = vmax.xlane.f32.xlu0 %v970
        %v972 = vpop.xlane.xlu0 %971
        %v973 = vsub.f32 %v967, %v972
        %v974 = vmul.f32 %v973, 1.442695
        %v975 = vpow.pop %v974
        %v976 = vsel %vm511, %v975, 0.0
        %977 = vadd.xlane.f32.xlu0 %v976
        %v978 = vpop.xlane.xlu0 %977
        %v979 = vrcp.pop %v978
        %v980 = vmul.f32 %v975, %v979
        %s981 = scalar_lea.vmem %s386, 56 [#allocation14]
        %982 = vst.msk [vmem:[%s981] sm:$0xff] %vm511, %v980
        %v983 = vpack.c.bf16 %v980, %v980
        %984 = vrot.lane.b32.xlu0 %v593, 100
        %v985 = vpop.permute.xlu0 %984
        %v987 = vsel %vm511, %v983, 0
        %v990 = vsel %vm528, %v985, 0
        %992 = vmatpush.bf16.msra.mxu0 0
        %993 = vmatpush.bf16.msra.mxu0 0
        %994 = vmatpush.bf16.msra.mxu0 0
        %995 = vmatpush.bf16.msra.mxu0 0
        %996 = vmatpush.bf16.msra.mxu0 0
        %997 = vmatpush.bf16.msra.mxu0 0
        %998 = vmatpush.bf16.msra.mxu0 0
        %999 = vmatpush.bf16.msra.mxu0 %v990
        %1000 = vmatmul.bf16.gmra.mxu0 %v987
        %v1001 = vpop.f32.mrf.mxu0
        %v1002 = vadd.f32 0.0, %v1001
        %v1003 = vpop.f32.mrf.mxu0
        %1004 = vdwg.mxu0
        %v1005 = vpack.c.bf16 %v1002, %v1002
        %1007 = vrot.lane.b32.xlu0 %v1005, 28
        %v1008 = vpop.permute.xlu0 %1007
        %vm1010 = vcmask 257248
        %1011 = vst.msk [vmem:[#allocation3] sm:$0xf] %vm1010, %v1008
        %v1012 = vld [vmem:[#allocation3] sm:$0xf]
        %s1013 = smul.addr %s390, 4
        %s1014 = scalar_lea.vmem [#allocation12], %s1013
        %v1015 = vld [vmem:[%s1014] sm:$0xf]
        %v1016 = vld [vmem:[%s1014 + $0x4] sm:$0xf]
        %v1017 = vld [vmem:[%s1014 + $0x8] sm:$0xf]
        %v1018 = vld [vmem:[%s1014 + $0xc] sm:$0xf]
        %v1023 = vunpack.c.l.b16 %v1015
        %v1024 = vunpack.c.l.b16 %v1016
        %v1025 = vunpack.c.l.b16 %v1017
        %v1026 = vunpack.c.l.b16 %v1018
        %v1027 = vpack.c.b16 %v1024, %v1023
        %v1028 = vpack.c.b16 %v1026, %v1025
        %v1032 = vsel %vm409, %v1012, 0
        %1034 = vmatpush.bf16.msra.mxu0 0
        %1035 = vmatpush.bf16.msra.mxu0 0
        %1036 = vmatpush.bf16.msra.mxu0 0
        %1037 = vmatpush.bf16.msra.mxu0 0
        %1038 = vmatpush.bf16.msra.mxu0 0
        %1039 = vmatpush.bf16.msra.mxu0 0
        %1040 = vmatpush.bf16.msra.mxu0 %v1028
        %1041 = vmatpush.bf16.msra.mxu0 %v1027
        %1042 = vmatmul.bf16.gmra.mxu0 %v1032
        %v1043 = vpop.f32.mrf.mxu0
        %v1044 = vadd.f32 0.0, %v1043
        %v1045 = vpop.f32.mrf.mxu0
        %1046 = vdwg.mxu0
        %p1047 = scmp.eq.s32.totalorder %s35, 0
        // Predicated region
        $region65: #{tpu_custom_call.1} parent=43 // pred_check
          %p1048 = pneg %p1047
        $region66: #{tpu_custom_call.1} parent=43 // pred_check_branch
          %1050 = sbr.rel (%p1048) target = $region68
        $region67: #{tpu_custom_call.1} parent=43 // pred_region
          %v1051 = vld [vmem:[%s5] sm:$0x1]
          %v1053 = vperm.slane %v1051, 0
          %1055 = vst.msk [vmem:[#allocation2] sm:$0xff] %vm409, %v1053
        $region68: #{tpu_custom_call.1} parent=43 // pred_fallthru
          _
        %v1056 = vld [vmem:[#allocation2] sm:$0xff]
        %v1057 = vadd.f32 %v1056, %v1044
        %1058 = vst.msk [vmem:[#allocation2] sm:$0xff] %vm409, %v1057
        // Predicated region
        $region69: #{tpu_custom_call.1} parent=43 // pred_check
          %p1059 = pneg %p1047
        $region70: #{tpu_custom_call.1} parent=43 // pred_check_branch
          %1061 = sbr.rel (%p1059) target = $region72
        $region71: #{tpu_custom_call.1} parent=43 // pred_region
          %v1062 = vld [vmem:[#allocation2] sm:$0xff]
          %1063 = vst.msk [vmem:[%s379] sm:$0xff] %vm409, %v1062
        $region72: #{tpu_custom_call.1} parent=43 // pred_fallthru
          _
        %s1064 = sand.u32 %s181, 1
        %s1065 = scalar_lea.sflag [#allocation6], %s1064
        %s1066 = sand.u32 %s181, 1
        %s1067 = smul.addr %s1066, 8
        %s1068 = scalar_lea.vmem [#allocation13], %s1067
        %s1069 = sand.u32 %s209, 1
        %s1070 = scalar_lea.sflag [#allocation15], %s1069
        %s1071 = sand.u32 %s209, 1
        %s1072 = smul.addr %s1071, 64
        %s1073 = scalar_lea.vmem [#allocation14], %s1072
        // Predicated region
        $region73: #{tpu_custom_call.1} parent=43 // pred_check
          %p1074 = pneg %p191
        $region74: #{tpu_custom_call.1} parent=43 // pred_check_branch
          %1076 = sbr.rel (%p1074) target = $region76
        $region75: #{tpu_custom_call.1} parent=43 // pred_region
          %1078 = vsyncadd %s1065, 0
          %s1079 = smul.addr %s34, 8
          %s1080 = scalar_lea.hbm %s6, %s1079
          %s1082 = sshll.u32 %s1068, 4
          %s1083 = int_to_ptr.vmem [resolvable:$true] %s1082
          %s1084 = sshll.u32 %s1080, 4
          %s1085 = int_to_ptr.hbm [resolvable:$true] %s1084
          %1087 = dma.vmem_to_hbm [thread:$0]  %s1083, 128, %s1085, %s1065
        $region76: #{tpu_custom_call.1} parent=43 // pred_fallthru
          _
        // Predicated region
        $region77: #{tpu_custom_call.1} parent=43 // pred_check
          %p1088 = pneg %p219
        $region78: #{tpu_custom_call.1} parent=43 // pred_check_branch
          %1090 = sbr.rel (%p1088) target = $region80
        $region79: #{tpu_custom_call.1} parent=43 // pred_region
          %s1091 = smul.u32 8, %s35
          %1093 = vsyncadd %s1070, 0
          %s1094 = smul.addr %s34, 8
          %s1095 = sadd.s32 %s1091, %s1094
          %s1096 = smul.addr %s1095, 8
          %s1097 = scalar_lea.hbm %s7, %s1096
          %s1098 = sshll.u32 %s1073, 4
          %s1099 = int_to_ptr.vmem [resolvable:$true] %s1098
          %s1100 = sshll.u32 %s1097, 4
          %s1101 = int_to_ptr.hbm [resolvable:$true] %s1100
          %1106 = dma.vmem_to_hbm [thread:$0]  %s1099, 1024, %s1101, %s1070, 128, 128, 8
        $region80: #{tpu_custom_call.1} parent=43 // pred_fallthru
          _
      $region44: #{tpu_custom_call.1} parent=5 // pred_fallthru
        _
      %p1107 = scmp.le.s32.totalorder 2, %s25
      // Predicated region
      $region81: #{tpu_custom_call.1} parent=5 // pred_check
        %p1108 = pneg %p1107
      $region82: #{tpu_custom_call.1} parent=5 // pred_check_branch
        %1110 = sbr.rel (%p1108) target = $region84
      $region83: #{tpu_custom_call.1} parent=5 // pred_region
        %s1111 = ssub.s32 %s25, 2
        // Predicated region
        $region85: #{tpu_custom_call.1} parent=83 // pred_check
          %p1112 = pneg %p197
        $region86: #{tpu_custom_call.1} parent=83 // pred_check_branch
          %1114 = sbr.rel (%p1112) target = $region88
        $region87: #{tpu_custom_call.1} parent=83 // pred_region
          %s1115 = sand.u32 %s182, 1
          %s1116 = scalar_lea.sflag [#allocation6], %s1115
          %s1117 = sand.u32 %s182, 1
          %s1118 = smul.addr %s1117, 8
          %s1119 = scalar_lea.vmem [#allocation13], %s1118
          %1121 = dma.done %s1116, 128
        $region88: #{tpu_custom_call.1} parent=83 // pred_fallthru
          _
        // Predicated region
        $region89: #{tpu_custom_call.1} parent=83 // pred_check
          %p1122 = pneg %p225
        $region90: #{tpu_custom_call.1} parent=83 // pred_check_branch
          %1124 = sbr.rel (%p1122) target = $region92
        $region91: #{tpu_custom_call.1} parent=83 // pred_region
          %s1125 = sand.u32 %s210, 1
          %s1126 = scalar_lea.sflag [#allocation15], %s1125
          %s1127 = sand.u32 %s210, 1
          %s1128 = smul.addr %s1127, 64
          %s1129 = scalar_lea.vmem [#allocation14], %s1128
          %1131 = dma.done %s1126, 1024
        $region92: #{tpu_custom_call.1} parent=83 // pred_fallthru
          _
      $region84: #{tpu_custom_call.1} parent=5 // pred_fallthru
        _
    $region6: #{tpu_custom_call.1} parent=1 // loop_footer
      %s29 = sadd.s32 1, %s25
    $region7: #{tpu_custom_call.1} parent=1 // loop_footer_branch
      %24 = sbr.rel target = $region3
    $region8: #{tpu_custom_call.1} parent=1 // loop_exit
      _
    %1132 = vsyncpa [#allocation5], 1
    %s1133 = scalar_lea.sflag [#allocation5], 1
    %1134 = vsyncpa %s1133, 1
    %1135 = vsyncpa [#allocation8], 1
    %1136 = vsyncpa [#allocation11], 1
    %1137 = vsyncpa [#allocation6], 1
    %s1138 = scalar_lea.sflag [#allocation6], 1
    %1139 = vsyncpa %s1138, 1
    %1140 = vsyncpa [#allocation15], 1
    %s1141 = scalar_lea.sflag [#allocation15], 1
    %1142 = vsyncpa %s1141, 1

</llo_original>
